<compile_context>
chip_gen: v7x
topology: tpu7x:2x2x1
jax: 0.10.0
libtpu: 0.0.40
codegen_flags: <defaults>
</compile_context>

<pallas_src>
import functools

import jax
import jax.numpy as jnp
from jax.experimental import pallas as pl
from jax.experimental.pallas import tpu as pltpu


def _round_up(x: int, m: int) -> int:
    return ((x + m - 1) // m) * m


def _cdiv(a: int, b: int) -> int:
    return (a + b - 1) // b


# ----------------------------------------------------------------------------
# Pallas kernel: one (1 batch x TF frames) tile of the log-mel spectrogram.
# Framing happens in-kernel from hop-sized chunks of the padded audio.
# ----------------------------------------------------------------------------
def _logmel_kernel(cur_ref, nxt_ref, basis_ref, fb_ref, out_ref):
    # cur_ref  : (1, hop, TF)              chunks [t*TF, (t+1)*TF), chunk idx in lanes
    # nxt_ref  : (1, hop, TF)              chunks [(t+1)*TF, (t+2)*TF)  (halo)
    # basis_ref: (2, J, n_freq_pad, hop)   windowed DFT basis [win*cos ; -win*sin]
    # fb_ref   : (n_mels_pad, n_freq_pad)  mel filterbank (transposed, padded, f32)
    # out_ref  : (1, n_mels_pad, TF)       f32 log-mel tile
    tf = cur_ref.shape[2]
    n_j = basis_ref.shape[1]

    # Frame f (lane f of this tile) is xp[f*hop : f*hop + n_fft], i.e. chunks
    # f, f+1, ..., f+J-1.  Only the first J-1 (< 128) lanes of the next block
    # are ever needed, so a 128-lane halo keeps the concat lane-aligned.
    slab = jnp.concatenate([cur_ref[0], nxt_ref[0, :, :128]], axis=1)  # (hop, TF+128)

    basis = basis_ref[...]                                             # (2,J,F,hop) bf16
    fb = fb_ref[...]                                                   # (M,F) f32

    def dft_half(c):  # c == 0 -> win*cos, c == 1 -> -win*sin
        acc = jnp.dot(basis[c, 0], slab[:, :tf],
                      preferred_element_type=jnp.float32)
        for j in range(1, n_j):
            acc = acc + jnp.dot(basis[c, j], slab[:, j:j + tf],
                                preferred_element_type=jnp.float32)
        return acc                                                     # (F, TF) f32

    re = dft_half(0)
    im = dft_half(1)
    power = re * re + im * im                                          # |X|^2, f32 VPU
    mel = jnp.dot(fb, power, preferred_element_type=jnp.float32)
    out_ref[0] = jnp.log(jnp.clip(mel, 1e-9, 1e9))


# ----------------------------------------------------------------------------
# Parameter / basis construction (deterministic, matches torchaudio defaults)
# ----------------------------------------------------------------------------
def _hann_window(n: int) -> jnp.ndarray:
    # torch.hann_window(n, periodic=True)
    return 0.5 * (1.0 - jnp.cos(2.0 * jnp.pi * jnp.arange(n, dtype=jnp.float32) / n))


def _mel_fbanks(n_freq: int, f_min: float, f_max: float, n_mels: int,
                sample_rate: int) -> jnp.ndarray:
    # torchaudio.functional.melscale_fbanks with norm=None, mel_scale="htk"
    def hz_to_mel(f):
        return 2595.0 * jnp.log10(1.0 + f / 700.0)

    def mel_to_hz(m):
        return 700.0 * (10.0 ** (m / 2595.0) - 1.0)

    all_freqs = jnp.linspace(0.0, sample_rate / 2.0, n_freq)
    m_pts = jnp.linspace(hz_to_mel(jnp.float32(f_min)),
                         hz_to_mel(jnp.float32(f_max)), n_mels + 2)
    f_pts = mel_to_hz(m_pts)                                   # (n_mels+2,)
    f_diff = f_pts[1:] - f_pts[:-1]                            # (n_mels+1,)
    slopes = f_pts[None, :] - all_freqs[:, None]               # (n_freq, n_mels+2)
    down = -slopes[:, :-2] / f_diff[:-1]
    up = slopes[:, 2:] / f_diff[1:]
    fb = jnp.maximum(0.0, jnp.minimum(down, up))               # (n_freq, n_mels)
    return fb.astype(jnp.float32)


# ----------------------------------------------------------------------------
# FeatureExtractor wrapper
# ----------------------------------------------------------------------------
class FeatureExtractor:
    def __init__(self, sample_rate: int, features: int, frame_tile: int = 1024,
                 compute_dtype=jnp.bfloat16):
        self.sample_rate = sample_rate
        self.features = features
        self.hop_length = sample_rate // 100
        self.n_fft = sample_rate // 40
        self.win_length = sample_rate // 40
        self.n_freq = self.n_fft // 2 + 1
        self.frame_tile = max(128, _round_up(frame_tile, 128))
        self.compute_dtype = compute_dtype

        # Lane/sublane-friendly padded sizes.
        self.n_freq_pad = _round_up(self.n_freq, 128)
        self.n_mels_pad = _round_up(features, 8)
        self.n_chunks_per_frame = _cdiv(self.n_fft, self.hop_length)   # J

        hop, J = self.hop_length, self.n_chunks_per_frame

        # Fused, windowed DFT basis: [win*cos ; -win*sin], zero-padded to
        # J*hop DFT columns, laid out as (2, J, n_freq_pad, hop) so per-chunk
        # slices are leading-dim (free) inside the kernel.
        win = _hann_window(self.win_length)
        n = jnp.arange(self.n_fft, dtype=jnp.float32)[None, :]
        k = jnp.arange(self.n_freq, dtype=jnp.float32)[:, None]
        ang = 2.0 * jnp.pi * k * n / self.n_fft
        cos_b = jnp.cos(ang) * win[None, :]                    # (n_freq, n_fft)
        sin_b = -jnp.sin(ang) * win[None, :]
        basis = jnp.zeros((2, self.n_freq_pad, J * hop), jnp.float32)
        basis = basis.at[0, : self.n_freq, : self.n_fft].set(cos_b)
        basis = basis.at[1, : self.n_freq, : self.n_fft].set(sin_b)
        self.basis = (basis.reshape(2, self.n_freq_pad, J, hop)
                      .transpose(0, 2, 1, 3).astype(compute_dtype))

        # Mel filterbank, transposed and zero-padded: (n_mels_pad, n_freq_pad).
        # Kept in f32 — the mel matmul and everything after it stays f32.
        fb = _mel_fbanks(self.n_freq, 0.0, sample_rate / 2.0, features,
                         sample_rate)                          # (n_freq, n_mels)
        fbT = jnp.zeros((self.n_mels_pad, self.n_freq_pad), jnp.float32)
        self.fbT = fbT.at[:features, : self.n_freq].set(fb.T)

    def out_len(self, input_lengths: jnp.ndarray) -> jnp.ndarray:
        dtype = jnp.int64 if jax.config.read("jax_enable_x64") else jnp.int32
        return (input_lengths // self.hop_length + 1).astype(dtype)

    @functools.partial(jax.jit, static_argnums=0)
    def __call__(self, input_signal: jnp.ndarray, length: jnp.ndarray):
        x = input_signal.astype(jnp.float32)
        B, T = x.shape
        hop = self.hop_length
        n_frames = T // hop + 1

        TF = min(self.frame_tile, _round_up(n_frames, 128))     # frames per tile
        if B == 1 and n_frames > 128:
            # Keep >= 2 frame tiles so both v7x TensorCores get work.
            TF = min(TF, _round_up(_cdiv(n_frames, 2), 128))
        n_frames_p = _round_up(n_frames, TF)
        n_tiles = n_frames_p // TF
        n_chunks_p = (n_tiles + 1) * TF      # +1 tile so the halo block t+1 is in-bounds

        # center=True reflect padding, then zero-extend to a whole number of
        # chunk tiles.  chunksT[b, h, c] = xp[b, c*hop + h].
        pad = self.n_fft // 2
        xp = jnp.pad(x, ((0, 0), (pad, pad)), mode="reflect")
        xp = jnp.pad(xp, ((0, 0), (0, n_chunks_p * hop - xp.shape[1])))
        chunksT = jnp.transpose(xp.reshape(B, n_chunks_p, hop), (0, 2, 1))
        chunksT = chunksT.astype(self.compute_dtype)

        n_freq_pad, n_mels_pad = self.n_freq_pad, self.n_mels_pad
        J = self.n_chunks_per_frame

        out = pl.pallas_call(
            _logmel_kernel,
            out_shape=jax.ShapeDtypeStruct((B, n_mels_pad, n_frames_p),
                                           jnp.float32),
            grid_spec=pltpu.PrefetchScalarGridSpec(
                num_scalar_prefetch=0,
                grid=(B, n_tiles),
                in_specs=[
                    pl.BlockSpec((1, hop, TF), lambda b, t: (b, 0, t)),
                    pl.BlockSpec((1, hop, TF), lambda b, t: (b, 0, t + 1)),
                    pl.BlockSpec((2, J, n_freq_pad, hop),
                                 lambda b, t: (0, 0, 0, 0)),
                    pl.BlockSpec((n_mels_pad, n_freq_pad),
                                 lambda b, t: (0, 0)),
                ],
                out_specs=pl.BlockSpec((1, n_mels_pad, TF),
                                       lambda b, t: (b, 0, t)),
            ),
            compiler_params=pltpu.CompilerParams(
                dimension_semantics=("parallel", "parallel"),
                vmem_limit_bytes=32 * 1024 * 1024,
            ),
        )(chunksT, chunksT, self.basis, self.fbT)

        # Already in PyTorch layout (B, n_mels, time); slice only if padded.
        if n_mels_pad != self.features or n_frames_p != n_frames:
            out = out[:, : self.features, :n_frames]
        return out, self.out_len(length)


# ----------------------------------------------------------------------------
# Demo + pure-JAX reference check
# ----------------------------------------------------------------------------
if __name__ == "__main__":
    # Small, consistent shapes: sample_rate=1600 -> n_fft=40, hop=16, J=3; 32 mels.
    sample_rate = 1600
    features = 32
    batch = 2
    T = 128  # -> n_frames = 128 // 16 + 1 = 9

    key = jax.random.PRNGKey(0)
    audio = jax.random.normal(key, (batch, T), dtype=jnp.float32)
    length = jnp.array([T, T // 2], dtype=jnp.int32)

    fe = FeatureExtractor(sample_rate, features)
    mel, out_len = fe(audio, length)
    mel = jax.block_until_ready(mel)
    out_len = jax.block_until_ready(out_len)

    n_frames = T // fe.hop_length + 1
    assert mel.shape == (batch, features, n_frames), mel.shape
    assert out_len.shape == (batch,)
    assert bool(jnp.all(jnp.isfinite(mel)))
    assert bool(jnp.all(out_len == jnp.array([9, 5], dtype=out_len.dtype)))

    # Pure-JAX reference: direct framing + einsum, using the same bf16-cast
    # inputs as the kernel and f32 accumulation.
    pad = fe.n_fft // 2
    xp = jnp.pad(audio, ((0, 0), (pad, pad)), mode="reflect")
    idx = (jnp.arange(n_frames)[None, :] * fe.hop_length
           + jnp.arange(fe.n_fft)[:, None])                    # (n_fft, n_frames)
    frames_T = xp[:, idx]                                      # (B, n_fft, n_frames)
    fr = frames_T.astype(fe.compute_dtype).astype(jnp.float32)
    basis2 = (fe.basis.transpose(0, 2, 1, 3)
              .reshape(2, fe.n_freq_pad, -1)[:, :, : fe.n_fft]
              .astype(jnp.float32))
    s_re = jnp.einsum("kn,bnf->bkf", basis2[0], fr, precision="highest")
    s_im = jnp.einsum("kn,bnf->bkf", basis2[1], fr, precision="highest")
    power = s_re * s_re + s_im * s_im
    mel_ref = jnp.einsum("mk,bkf->bmf", fe.fbT, power, precision="highest")
    mel_ref = jnp.log(jnp.clip(mel_ref, 1e-9, 1e9))[:, :features, :]
    max_err = float(jnp.max(jnp.abs(mel - mel_ref)))
    assert bool(jnp.allclose(mel, mel_ref, rtol=2e-3, atol=2e-3)), max_err

    print("KERNEL_OK")
</pallas_src>

<mosaic_0001>
module attributes {stable_mosaic.version = 11 : i64} {
  func.func @_logmel_kernel(%arg0: i32, %arg1: i32, %arg2: memref<1x16x128xbf16, #tpu.memory_space<vmem>>, %arg3: memref<1x16x128xbf16, #tpu.memory_space<vmem>>, %arg4: memref<2x3x128x16xbf16, #tpu.memory_space<vmem>>, %arg5: memref<32x128xf32, #tpu.memory_space<vmem>>, %arg6: memref<1x32x128xf32, #tpu.memory_space<vmem>>) attributes {dimension_semantics = [#tpu.dimension_semantics<parallel>, #tpu.dimension_semantics<parallel>], iteration_bounds = array<i64: 2, 1>, scalar_prefetch = 0 : i64, scratch_operands = 0 : i64, tpu.core_type = #tpu.core_type<tc>, window_params = [{transform_indices = @transform_0, window_bounds = array<i64: 1, 16, 128>}, {transform_indices = @transform_1, window_bounds = array<i64: 1, 16, 128>}, {pipeline_mode = #tpu.pipeline_mode<synchronous>, transform_indices = @transform_2, window_bounds = array<i64: 2, 3, 128, 16>}, {pipeline_mode = #tpu.pipeline_mode<synchronous>, transform_indices = @transform_3, window_bounds = array<i64: 32, 128>}, {transform_indices = @transform_4, window_bounds = array<i64: 1, 32, 128>}]} {
    %c0 = arith.constant 0 : index
    %c0_0 = arith.constant 0 : index
    %c0_1 = arith.constant 0 : index
    %0 = vector.load %arg2[%c0, %c0_0, %c0_1] : memref<1x16x128xbf16, #tpu.memory_space<vmem>>, vector<1x16x128xbf16>
    %1 = vector.shape_cast %0 : vector<1x16x128xbf16> to vector<16x128xbf16>
    %c0_2 = arith.constant 0 : index
    %c0_3 = arith.constant 0 : index
    %c0_4 = arith.constant 0 : index
    %2 = vector.load %arg3[%c0_2, %c0_3, %c0_4] : memref<1x16x128xbf16, #tpu.memory_space<vmem>>, vector<1x16x128xbf16>
    %3 = vector.shape_cast %2 : vector<1x16x128xbf16> to vector<16x128xbf16>
    %4 = tpu.concatenate %1, %3 in 1 : vector<16x128xbf16>, vector<16x128xbf16> -> vector<16x256xbf16>
    %c0_5 = arith.constant 0 : index
    %c0_6 = arith.constant 0 : index
    %c0_7 = arith.constant 0 : index
    %c0_8 = arith.constant 0 : index
    %5 = vector.load %arg4[%c0_5, %c0_6, %c0_7, %c0_8] : memref<2x3x128x16xbf16, #tpu.memory_space<vmem>>, vector<2x3x128x16xbf16>
    %c0_9 = arith.constant 0 : index
    %c0_10 = arith.constant 0 : index
    %6 = vector.load %arg5[%c0_9, %c0_10] : memref<32x128xf32, #tpu.memory_space<vmem>>, vector<32x128xf32>
    %7 = vector.extract_strided_slice %5 {offsets = [0, 0, 0, 0], sizes = [1, 1, 128, 16], strides = [1, 1, 1, 1]} : vector<2x3x128x16xbf16> to vector<1x1x128x16xbf16>
    %8 = vector.shape_cast %7 : vector<1x1x128x16xbf16> to vector<128x16xbf16>
    %9 = vector.extract_strided_slice %4 {offsets = [0, 0], sizes = [16, 128], strides = [1, 1]} : vector<16x256xbf16> to vector<16x128xbf16>
    %cst = arith.constant dense<0.000000e+00> : vector<128x128xf32>
    %10 = tpu.matmul %8, %9, %cst {dimension_numbers = #tpu.dot_dimension_numbers<[1], [0], [0], [1], [0, 0, 1, 1], [], []>} : vector<128x16xbf16>, vector<16x128xbf16>, vector<128x128xf32> -> vector<128x128xf32>
    %11 = vector.extract_strided_slice %5 {offsets = [0, 1, 0, 0], sizes = [1, 1, 128, 16], strides = [1, 1, 1, 1]} : vector<2x3x128x16xbf16> to vector<1x1x128x16xbf16>
    %12 = vector.shape_cast %11 : vector<1x1x128x16xbf16> to vector<128x16xbf16>
    %13 = vector.extract_strided_slice %4 {offsets = [0, 1], sizes = [16, 128], strides = [1, 1]} : vector<16x256xbf16> to vector<16x128xbf16>
    %cst_11 = arith.constant dense<0.000000e+00> : vector<128x128xf32>
    %14 = tpu.matmul %12, %13, %cst_11 {dimension_numbers = #tpu.dot_dimension_numbers<[1], [0], [0], [1], [0, 0, 1, 1], [], []>} : vector<128x16xbf16>, vector<16x128xbf16>, vector<128x128xf32> -> vector<128x128xf32>
    %15 = arith.addf %10, %14 : vector<128x128xf32>
    %16 = vector.extract_strided_slice %5 {offsets = [0, 2, 0, 0], sizes = [1, 1, 128, 16], strides = [1, 1, 1, 1]} : vector<2x3x128x16xbf16> to vector<1x1x128x16xbf16>
    %17 = vector.shape_cast %16 : vector<1x1x128x16xbf16> to vector<128x16xbf16>
    %18 = vector.extract_strided_slice %4 {offsets = [0, 2], sizes = [16, 128], strides = [1, 1]} : vector<16x256xbf16> to vector<16x128xbf16>
    %cst_12 = arith.constant dense<0.000000e+00> : vector<128x128xf32>
    %19 = tpu.matmul %17, %18, %cst_12 {dimension_numbers = #tpu.dot_dimension_numbers<[1], [0], [0], [1], [0, 0, 1, 1], [], []>} : vector<128x16xbf16>, vector<16x128xbf16>, vector<128x128xf32> -> vector<128x128xf32>
    %20 = arith.addf %15, %19 : vector<128x128xf32>
    %21 = vector.extract_strided_slice %5 {offsets = [1, 0, 0, 0], sizes = [1, 1, 128, 16], strides = [1, 1, 1, 1]} : vector<2x3x128x16xbf16> to vector<1x1x128x16xbf16>
    %22 = vector.shape_cast %21 : vector<1x1x128x16xbf16> to vector<128x16xbf16>
    %23 = vector.extract_strided_slice %4 {offsets = [0, 0], sizes = [16, 128], strides = [1, 1]} : vector<16x256xbf16> to vector<16x128xbf16>
    %cst_13 = arith.constant dense<0.000000e+00> : vector<128x128xf32>
    %24 = tpu.matmul %22, %23, %cst_13 {dimension_numbers = #tpu.dot_dimension_numbers<[1], [0], [0], [1], [0, 0, 1, 1], [], []>} : vector<128x16xbf16>, vector<16x128xbf16>, vector<128x128xf32> -> vector<128x128xf32>
    %25 = vector.extract_strided_slice %5 {offsets = [1, 1, 0, 0], sizes = [1, 1, 128, 16], strides = [1, 1, 1, 1]} : vector<2x3x128x16xbf16> to vector<1x1x128x16xbf16>
    %26 = vector.shape_cast %25 : vector<1x1x128x16xbf16> to vector<128x16xbf16>
    %27 = vector.extract_strided_slice %4 {offsets = [0, 1], sizes = [16, 128], strides = [1, 1]} : vector<16x256xbf16> to vector<16x128xbf16>
    %cst_14 = arith.constant dense<0.000000e+00> : vector<128x128xf32>
    %28 = tpu.matmul %26, %27, %cst_14 {dimension_numbers = #tpu.dot_dimension_numbers<[1], [0], [0], [1], [0, 0, 1, 1], [], []>} : vector<128x16xbf16>, vector<16x128xbf16>, vector<128x128xf32> -> vector<128x128xf32>
    %29 = arith.addf %24, %28 : vector<128x128xf32>
    %30 = vector.extract_strided_slice %5 {offsets = [1, 2, 0, 0], sizes = [1, 1, 128, 16], strides = [1, 1, 1, 1]} : vector<2x3x128x16xbf16> to vector<1x1x128x16xbf16>
    %31 = vector.shape_cast %30 : vector<1x1x128x16xbf16> to vector<128x16xbf16>
    %32 = vector.extract_strided_slice %4 {offsets = [0, 2], sizes = [16, 128], strides = [1, 1]} : vector<16x256xbf16> to vector<16x128xbf16>
    %cst_15 = arith.constant dense<0.000000e+00> : vector<128x128xf32>
    %33 = tpu.matmul %31, %32, %cst_15 {dimension_numbers = #tpu.dot_dimension_numbers<[1], [0], [0], [1], [0, 0, 1, 1], [], []>} : vector<128x16xbf16>, vector<16x128xbf16>, vector<128x128xf32> -> vector<128x128xf32>
    %34 = arith.addf %29, %33 : vector<128x128xf32>
    %35 = arith.mulf %20, %20 : vector<128x128xf32>
    %36 = arith.mulf %34, %34 : vector<128x128xf32>
    %37 = arith.addf %35, %36 : vector<128x128xf32>
    %cst_16 = arith.constant dense<0.000000e+00> : vector<32x128xf32>
    %38 = tpu.matmul %6, %37, %cst_16 {dimension_numbers = #tpu.dot_dimension_numbers<[1], [0], [0], [1], [0, 0, 1, 1], [], []>} : vector<32x128xf32>, vector<128x128xf32>, vector<32x128xf32> -> vector<32x128xf32>
    %cst_17 = arith.constant 9.99999971E-10 : f32
    %cst_18 = arith.constant 1.000000e+09 : f32
    %39 = vector.broadcast %cst_17 : f32 to vector<32x128xf32>
    %40 = arith.maximumf %39, %38 : vector<32x128xf32>
    %41 = vector.broadcast %cst_18 : f32 to vector<32x128xf32>
    %42 = arith.minimumf %41, %40 : vector<32x128xf32>
    %43 = math.log %42 : vector<32x128xf32>
    %c0_19 = arith.constant 0 : index
    %c0_20 = arith.constant 0 : index
    %c0_21 = arith.constant 0 : index
    %44 = vector.load %arg6[%c0_19, %c0_20, %c0_21] : memref<1x32x128xf32, #tpu.memory_space<vmem>>, vector<1x32x128xf32>
    %45 = vector.shape_cast %44 : vector<1x32x128xf32> to vector<32x128xf32>
    %46 = vector.shape_cast %43 : vector<32x128xf32> to vector<1x32x128xf32>
    tpu.vector_store %arg6[%c0_19, %c0_20, %c0_21], %46 {strides = array<i32>} : memref<1x32x128xf32, #tpu.memory_space<vmem>>, vector<1x32x128xf32>,
    return
  }
  func.func @transform_0(%arg0: i32, %arg1: i32) -> (i32, i32, i32) {
    %c0_i32 = arith.constant 0 : i32
    %c0_i32_0 = arith.constant 0 : i32
    return %arg0, %c0_i32, %arg1 : i32, i32, i32
  }
  func.func @transform_1(%arg0: i32, %arg1: i32) -> (i32, i32, i32) {
    %c1_i32 = arith.constant 1 : i32
    %0 = arith.addi %arg1, %c1_i32 : i32
    %c0_i32 = arith.constant 0 : i32
    %c0_i32_0 = arith.constant 0 : i32
    return %arg0, %c0_i32, %0 : i32, i32, i32
  }
  func.func @transform_2(%arg0: i32, %arg1: i32) -> (i32, i32, i32, i32) {
    %c0_i32 = arith.constant 0 : i32
    %c0_i32_0 = arith.constant 0 : i32
    %c0_i32_1 = arith.constant 0 : i32
    %c0_i32_2 = arith.constant 0 : i32
    %c0_i32_3 = arith.constant 0 : i32
    return %c0_i32, %c0_i32_0, %c0_i32_1, %c0_i32_2 : i32, i32, i32, i32
  }
  func.func @transform_3(%arg0: i32, %arg1: i32) -> (i32, i32) {
    %c0_i32 = arith.constant 0 : i32
    %c0_i32_0 = arith.constant 0 : i32
    %c0_i32_1 = arith.constant 0 : i32
    return %c0_i32, %c0_i32_0 : i32, i32
  }
  func.func @transform_4(%arg0: i32, %arg1: i32) -> (i32, i32, i32) {
    %c0_i32 = arith.constant 0 : i32
    %c0_i32_0 = arith.constant 0 : i32
    return %arg0, %c0_i32, %arg1 : i32, i32, i32
  }
}

</mosaic_0001>

<llo_original>
// kernel: a_call__.1
$region0: #{a_call__.1}
  #allocation0 [shape = 'u32[]', space=smem, size = 0x4, offset = 0x4, fixed_abs, tag = 'smem constant byte address 0x4 - core index']
  #allocation1 [shape = 'u32[144,128]{1,0:T(1,128)}', space=vmem, size = 0x12000, scoped, tag = 'internal scratch']
  %s0 = inlined_call_operand.vmem [shape: bf16[2,16,256], index: 0, kind: input, shape index: {}, may-alias: {0,1}]
  %s1 = inlined_call_operand.vmem [shape: bf16[2,16,256], index: 1, kind: input, shape index: {}, may-alias: {0,1}]
  %s2 = inlined_call_operand.vmem [shape: bf16[2,3,128,16], index: 2, kind: input, shape index: {}]
  %s3 = inlined_call_operand.vmem [shape: f32[32,128], index: 3, kind: input, shape index: {}]
  %s4 = inlined_call_operand.vmem [shape: f32[2,32,128], index: 4, kind: output, shape index: {}]
  %s5 = sld [smem:[#allocation0]]
  $region131: #{a_call__.1} parent=0
    _
  %s7 = ssub.s32 1, %s5
  %s8 = scalar_select 0, %s7, %s5
  $region1: #{a_call__.1} parent=0
    #allocation2 [shape = 'u8[8192]{0}', space=vmem, size = 0x2000, scoped, tag = 'input window, operand 0']
    #allocation3 [shape = 'u8[8192]{0}', space=vmem, size = 0x2000, scoped, tag = 'input window, operand 1']
    loop: start=0, step=1, limit=4
    $region2: #{a_call__.1} parent=1 // loop_pre_header
      _
    $region3: #{a_call__.1} parent=1 // loop_header
      %s10 = sphi 0, %s14
      %p11 = scmp.ge.s32.totalorder %s10, 4
      %s17 = sphi 0, %s29
      %s18 = sphi 0, %s25
      %s19 = sphi 0, %s17
      %s20 = sphi 0, %s18
      %s21 = sphi 0, %s19
      %s22 = sphi 0, %s20
      %s34 = sphi 0, %s36
      %s37 = sphi 0, %s34
      %s38 = sphi 0, %s37
      %s54 = sphi 0, %s38
      %s64 = sphi 0, %s66
      %s67 = sphi 0, %s64
      %s68 = sphi 0, %s67
      %s84 = sphi 0, %s68
      %s88 = sphi 0, %s88
      %s90 = sphi 0, %s88
      %s91 = sphi 0, %s90
      %s105 = sphi 0, %s91
      %s109 = sphi 0, %s109
      %s111 = sphi 0, %s109
      %s112 = sphi 0, %s111
      %s126 = sphi 0, %s112
      %s134 = sphi 0, %s136
      %s137 = sphi 0, %s134
      %s138 = sphi 0, %s137
      %s154 = sphi 0, %s138
    $region4: #{a_call__.1} parent=1 // loop_header_branch
      %13 = sbr.rel (%p11) target = $region8
    $region5: #{a_call__.1} parent=1 // loop_body
      %s15 = ssub.s32 %s10, 1
      %s16 = ssub.s32 %s10, 2
      %s23 = sadd.s32 1, %s18
      %p24 = scmp.ge.s32.totalorder %s23, 1
      %s25 = scalar_select %p24, 0, %s23
      %s26 = sadd.s32 1, %s17
      %s27 = scalar_select %p24, %s26, %s17
      %p28 = scmp.ge.s32.totalorder %s27, 2
      %s29 = scalar_select %p28, 0, %s27
      %s30 = ssub.s32 %s17, %s29
      %s31 = ssub.s32 %s18, %s25
      %s32 = sor.u32 %s30, %s31
      %p33 = scmp.eq.s32.totalorder %s32, 0
      %s35 = sadd.s32 %s34, 1
      %s36 = scalar_select %p33, %s34, %s35
      %p39 = pneg %p33
      %p40 = scmp.eq.s32.totalorder %s10, 1
      %p41 = por %p39, %p40
      %p42 = scmp.ne.s32.totalorder %s34, %s37
      %p43 = scmp.eq.s32.totalorder %s10, 0
      %p44 = por %p42, %p43
      %p45 = scmp.ne.s32.totalorder %s34, %s37
      %p46 = scmp.eq.s32.totalorder %s15, 1
      %p47 = por %p45, %p46
      %p48 = scmp.ne.s32.totalorder %s37, %s38
      %p49 = scmp.eq.s32.totalorder %s15, 0
      %p50 = por %p48, %p49
      %p51 = scmp.ne.s32.totalorder %s37, %s38
      %p52 = scmp.eq.s32.totalorder %s16, 1
      %p53 = por %p51, %p52
      %p55 = scmp.ne.s32.totalorder %s38, %s54
      %p56 = scmp.eq.s32.totalorder %s16, 0
      %p57 = por %p55, %p56
      %s58 = sadd.s32 %s18, 1
      %s59 = sadd.s32 %s25, 1
      %s60 = ssub.s32 %s17, %s29
      %s61 = ssub.s32 %s58, %s59
      %s62 = sor.u32 %s60, %s61
      %p63 = scmp.eq.s32.totalorder %s62, 0
      %s65 = sadd.s32 %s64, 1
      %s66 = scalar_select %p63, %s64, %s65
      %p69 = pneg %p63
      %p70 = scmp.eq.s32.totalorder %s10, 1
      %p71 = por %p69, %p70
      %p72 = scmp.ne.s32.totalorder %s64, %s67
      %p73 = scmp.eq.s32.totalorder %s10, 0
      %p74 = por %p72, %p73
      %p75 = scmp.ne.s32.totalorder %s64, %s67
      %p76 = scmp.eq.s32.totalorder %s15, 1
      %p77 = por %p75, %p76
      %p78 = scmp.ne.s32.totalorder %s67, %s68
      %p79 = scmp.eq.s32.totalorder %s15, 0
      %p80 = por %p78, %p79
      %p81 = scmp.ne.s32.totalorder %s67, %s68
      %p82 = scmp.eq.s32.totalorder %s16, 1
      %p83 = por %p81, %p82
      %p85 = scmp.ne.s32.totalorder %s68, %s84
      %p86 = scmp.eq.s32.totalorder %s16, 0
      %p87 = por %p85, %p86
      %s89 = sadd.s32 %s88, 1
      %p92 = scmp.eq.s32.totalorder %s10, 1
      %p93 = scmp.ne.s32.totalorder %s88, %s90
      %p94 = scmp.eq.s32.totalorder %s10, 0
      %p95 = por %p93, %p94
      %p96 = scmp.ne.s32.totalorder %s88, %s90
      %p97 = scmp.eq.s32.totalorder %s15, 1
      %p98 = por %p96, %p97
      %p99 = scmp.ne.s32.totalorder %s90, %s91
      %p100 = scmp.eq.s32.totalorder %s15, 0
      %p101 = por %p99, %p100
      %p102 = scmp.ne.s32.totalorder %s90, %s91
      %p103 = scmp.eq.s32.totalorder %s16, 1
      %p104 = por %p102, %p103
      %p106 = scmp.ne.s32.totalorder %s91, %s105
      %p107 = scmp.eq.s32.totalorder %s16, 0
      %p108 = por %p106, %p107
      %s110 = sadd.s32 %s109, 1
      %p113 = scmp.eq.s32.totalorder %s10, 1
      %p114 = scmp.ne.s32.totalorder %s109, %s111
      %p115 = scmp.eq.s32.totalorder %s10, 0
      %p116 = por %p114, %p115
      %p117 = scmp.ne.s32.totalorder %s109, %s111
      %p118 = scmp.eq.s32.totalorder %s15, 1
      %p119 = por %p117, %p118
      %p120 = scmp.ne.s32.totalorder %s111, %s112
      %p121 = scmp.eq.s32.totalorder %s15, 0
      %p122 = por %p120, %p121
      %p123 = scmp.ne.s32.totalorder %s111, %s112
      %p124 = scmp.eq.s32.totalorder %s16, 1
      %p125 = por %p123, %p124
      %p127 = scmp.ne.s32.totalorder %s112, %s126
      %p128 = scmp.eq.s32.totalorder %s16, 0
      %p129 = por %p127, %p128
      %s130 = ssub.s32 %s17, %s29
      %s131 = ssub.s32 %s18, %s25
      %s132 = sor.u32 %s130, %s131
      %p133 = scmp.eq.s32.totalorder %s132, 0
      %s135 = sadd.s32 %s134, 1
      %s136 = scalar_select %p133, %s134, %s135
      %p139 = pneg %p133
      %p140 = scmp.eq.s32.totalorder %s10, 1
      %p141 = por %p139, %p140
      %p142 = scmp.ne.s32.totalorder %s134, %s137
      %p143 = scmp.eq.s32.totalorder %s10, 0
      %p144 = por %p142, %p143
      %p145 = scmp.ne.s32.totalorder %s134, %s137
      %p146 = scmp.eq.s32.totalorder %s15, 1
      %p147 = por %p145, %p146
      %p148 = scmp.ne.s32.totalorder %s137, %s138
      %p149 = scmp.eq.s32.totalorder %s15, 0
      %p150 = por %p148, %p149
      %p151 = scmp.ne.s32.totalorder %s137, %s138
      %p152 = scmp.eq.s32.totalorder %s16, 1
      %p153 = por %p151, %p152
      %p155 = scmp.ne.s32.totalorder %s138, %s154
      %p156 = scmp.eq.s32.totalorder %s16, 0
      %p157 = por %p155, %p156
      %p158 = scmp.le.s32.totalorder 1, %s10
      %p159 = scmp.lt.s32.totalorder %s10, 3
      %p160 = pnand %p158, %p159
      %p161 = pneg %p160
      // Predicated region
      $region9: #{a_call__.1} parent=5 // pred_check
        _
      $region10: #{a_call__.1} parent=5 // pred_check_branch
        %163 = sbr.rel (%p160) target = $region12
      $region11: #{a_call__.1} parent=5 // pred_region
        %s164 = ssub.s32 %s10, 1
        // Predicated region
        $region13: #{a_call__.1} parent=11 // pred_check
          %p165 = pneg %p101
        $region14: #{a_call__.1} parent=11 // pred_check_branch
          %167 = sbr.rel (%p165) target = $region16
        $region15: #{a_call__.1} parent=11 // pred_region
          _
        $region16: #{a_call__.1} parent=11 // pred_fallthru
          _
        // Predicated region
        $region17: #{a_call__.1} parent=11 // pred_check
          %p168 = pneg %p122
        $region18: #{a_call__.1} parent=11 // pred_check_branch
          %170 = sbr.rel (%p168) target = $region20
        $region19: #{a_call__.1} parent=11 // pred_region
          _
        $region20: #{a_call__.1} parent=11 // pred_fallthru
          _
      $region12: #{a_call__.1} parent=5 // pred_fallthru
        _
      %p171 = scmp.lt.s32.totalorder %s10, 2
      // Predicated region
      $region21: #{a_call__.1} parent=5 // pred_check
        %p172 = pneg %p171
      $region22: #{a_call__.1} parent=5 // pred_check_branch
        %174 = sbr.rel (%p172) target = $region24
      $region23: #{a_call__.1} parent=5 // pred_region
        // Predicated region
        $region25: #{a_call__.1} parent=23 // pred_check
          %p175 = pneg %p44
        $region26: #{a_call__.1} parent=23 // pred_check_branch
          %177 = sbr.rel (%p175) target = $region28
        $region27: #{a_call__.1} parent=23 // pred_region
          %s178 = sand.u32 %s34, 1
          %s179 = sand.u32 %s34, 1
          %s180 = smul.addr %s179, 8
          %s181 = scalar_lea.vmem [#allocation2], %s180
          %s182 = smul.addr %s17, 4
          %s183 = sadd.s32 %s18, %s182
          %s184 = smul.addr %s183, 4
          %s185 = scalar_lea.vmem %s0, %s184
          // Predicated region
          $region29: #{a_call__.1} parent=27 // pred_check
            _
          $region30: #{a_call__.1} parent=27 // pred_check_branch
            %187 = sbr.rel (0) target = $region32
          $region31: #{a_call__.1} parent=27 // pred_region
            // Predicated region
            $region33: #{a_call__.1} parent=31 // pred_check
              _
            $region34: #{a_call__.1} parent=31 // pred_check_branch
              %189 = sbr.rel target = $region36
            $region35: #{a_call__.1} parent=31 // pred_region
              // Predicated region
              $region48: #{a_call__.1} parent=35 // pred_check
                _
              $region49: #{a_call__.1} parent=35 // pred_check_branch
                %206 = sbr.rel (0) target = $region51
              $region50: #{a_call__.1} parent=35 // pred_region
                loop: start=0, step=1, limit=1
                $region52: #{a_call__.1} parent=50 // loop_pre_header
                  _
                $region53: #{a_call__.1} parent=50 // loop_header
                  %s208 = sphi 0, %s212
                  %p209 = scmp.ge.s32.totalorder %s208, 1
                  %s213 = sphi %s185, %s185
                  %s214 = sphi %s181, %s181
                $region54: #{a_call__.1} parent=50 // loop_header_branch
                  %211 = sbr.rel (%p209) target = $region58
                $region55: #{a_call__.1} parent=50 // loop_body
                  _
                $region56: #{a_call__.1} parent=50 // loop_footer
                  %s212 = sadd.s32 1, %s208
                $region57: #{a_call__.1} parent=50 // loop_footer_branch
                  %207 = sbr.rel target = $region53
                $region58: #{a_call__.1} parent=50 // loop_exit
                  _
                loop: start=0, step=1, limit=1
                $region59: #{a_call__.1} parent=50 // loop_pre_header
                  _
                $region60: #{a_call__.1} parent=50 // loop_header
                  %s217 = sphi 0, %s221
                  %p218 = scmp.ge.s32.totalorder %s217, 1
                  %s222 = sphi %s185, %s185
                  %s223 = sphi %s181, %s181
                $region61: #{a_call__.1} parent=50 // loop_header_branch
                  %220 = sbr.rel (%p218) target = $region65
                $region62: #{a_call__.1} parent=50 // loop_body
                  %v224 = vld [vmem:[%s222] sm:$0xf]
                  %225 = vst [vmem:[%s223] sm:$0xf] %v224
                  %v226 = vld [vmem:[%s222 + $0x8] sm:$0xf]
                  %227 = vst [vmem:[%s223 + $0x4] sm:$0xf] %v226
                $region63: #{a_call__.1} parent=50 // loop_footer
                  %s221 = sadd.s32 1, %s217
                $region64: #{a_call__.1} parent=50 // loop_footer_branch
                  %216 = sbr.rel target = $region60
                $region65: #{a_call__.1} parent=50 // loop_exit
                  _
              $region51: #{a_call__.1} parent=35 // pred_fallthru
                _
            $region36: #{a_call__.1} parent=31 // pred_fallthru
              _
            // Predicated region
            $region37: #{a_call__.1} parent=31 // pred_check
              _
            $region38: #{a_call__.1} parent=31 // pred_check_branch
              %191 = sbr.rel (0) target = $region40
            $region39: #{a_call__.1} parent=31 // pred_region
              loop: start=0, step=1, limit=1
              $region41: #{a_call__.1} parent=39 // loop_pre_header
                _
              $region42: #{a_call__.1} parent=39 // loop_header
                %s194 = sphi 0, %s198
                %p195 = scmp.ge.s32.totalorder %s194, 1
                %s199 = sphi %s185, %s185
                %s200 = sphi %s181, %s181
              $region43: #{a_call__.1} parent=39 // loop_header_branch
                %197 = sbr.rel (%p195) target = $region47
              $region44: #{a_call__.1} parent=39 // loop_body
                %v201 = vld [vmem:[%s199] sm:$0xf]
                %202 = vst [vmem:[%s200] sm:$0xf] %v201
                %v203 = vld [vmem:[%s199 + $0x8] sm:$0xf]
                %204 = vst [vmem:[%s200 + $0x4] sm:$0xf] %v203
              $region45: #{a_call__.1} parent=39 // loop_footer
                %s198 = sadd.s32 1, %s194
              $region46: #{a_call__.1} parent=39 // loop_footer_branch
                %193 = sbr.rel target = $region42
              $region47: #{a_call__.1} parent=39 // loop_exit
                _
            $region40: #{a_call__.1} parent=31 // pred_fallthru
              _
          $region32: #{a_call__.1} parent=27 // pred_fallthru
            _
          %228 = vnop
        $region28: #{a_call__.1} parent=23 // pred_fallthru
          _
        // Predicated region
        $region66: #{a_call__.1} parent=23 // pred_check
          %p229 = pneg %p74
        $region67: #{a_call__.1} parent=23 // pred_check_branch
          %231 = sbr.rel (%p229) target = $region69
        $region68: #{a_call__.1} parent=23 // pred_region
          %s232 = sand.u32 %s64, 1
          %s233 = sand.u32 %s64, 1
          %s234 = smul.addr %s233, 8
          %s235 = scalar_lea.vmem [#allocation3], %s234
          %s236 = sadd.s32 %s18, 1
          %s237 = smul.addr %s17, 4
          %s238 = sadd.s32 %s236, %s237
          %s239 = smul.addr %s238, 4
          %s240 = scalar_lea.vmem %s1, %s239
          // Predicated region
          $region70: #{a_call__.1} parent=68 // pred_check
            _
          $region71: #{a_call__.1} parent=68 // pred_check_branch
            %242 = sbr.rel (0) target = $region73
          $region72: #{a_call__.1} parent=68 // pred_region
            // Predicated region
            $region74: #{a_call__.1} parent=72 // pred_check
              _
            $region75: #{a_call__.1} parent=72 // pred_check_branch
              %244 = sbr.rel target = $region77
            $region76: #{a_call__.1} parent=72 // pred_region
              // Predicated region
              $region89: #{a_call__.1} parent=76 // pred_check
                _
              $region90: #{a_call__.1} parent=76 // pred_check_branch
                %261 = sbr.rel (0) target = $region92
              $region91: #{a_call__.1} parent=76 // pred_region
                loop: start=0, step=1, limit=1
                $region93: #{a_call__.1} parent=91 // loop_pre_header
                  _
                $region94: #{a_call__.1} parent=91 // loop_header
                  %s263 = sphi 0, %s267
                  %p264 = scmp.ge.s32.totalorder %s263, 1
                  %s268 = sphi %s240, %s240
                  %s269 = sphi %s235, %s235
                $region95: #{a_call__.1} parent=91 // loop_header_branch
                  %266 = sbr.rel (%p264) target = $region99
                $region96: #{a_call__.1} parent=91 // loop_body
                  _
                $region97: #{a_call__.1} parent=91 // loop_footer
                  %s267 = sadd.s32 1, %s263
                $region98: #{a_call__.1} parent=91 // loop_footer_branch
                  %262 = sbr.rel target = $region94
                $region99: #{a_call__.1} parent=91 // loop_exit
                  _
                loop: start=0, step=1, limit=1
                $region100: #{a_call__.1} parent=91 // loop_pre_header
                  _
                $region101: #{a_call__.1} parent=91 // loop_header
                  %s272 = sphi 0, %s276
                  %p273 = scmp.ge.s32.totalorder %s272, 1
                  %s277 = sphi %s240, %s240
                  %s278 = sphi %s235, %s235
                $region102: #{a_call__.1} parent=91 // loop_header_branch
                  %275 = sbr.rel (%p273) target = $region106
                $region103: #{a_call__.1} parent=91 // loop_body
                  %v279 = vld [vmem:[%s277] sm:$0xf]
                  %280 = vst [vmem:[%s278] sm:$0xf] %v279
                  %v281 = vld [vmem:[%s277 + $0x8] sm:$0xf]
                  %282 = vst [vmem:[%s278 + $0x4] sm:$0xf] %v281
                $region104: #{a_call__.1} parent=91 // loop_footer
                  %s276 = sadd.s32 1, %s272
                $region105: #{a_call__.1} parent=91 // loop_footer_branch
                  %271 = sbr.rel target = $region101
                $region106: #{a_call__.1} parent=91 // loop_exit
                  _
              $region92: #{a_call__.1} parent=76 // pred_fallthru
                _
            $region77: #{a_call__.1} parent=72 // pred_fallthru
              _
            // Predicated region
            $region78: #{a_call__.1} parent=72 // pred_check
              _
            $region79: #{a_call__.1} parent=72 // pred_check_branch
              %246 = sbr.rel (0) target = $region81
            $region80: #{a_call__.1} parent=72 // pred_region
              loop: start=0, step=1, limit=1
              $region82: #{a_call__.1} parent=80 // loop_pre_header
                _
              $region83: #{a_call__.1} parent=80 // loop_header
                %s249 = sphi 0, %s253
                %p250 = scmp.ge.s32.totalorder %s249, 1
                %s254 = sphi %s240, %s240
                %s255 = sphi %s235, %s235
              $region84: #{a_call__.1} parent=80 // loop_header_branch
                %252 = sbr.rel (%p250) target = $region88
              $region85: #{a_call__.1} parent=80 // loop_body
                %v256 = vld [vmem:[%s254] sm:$0xf]
                %257 = vst [vmem:[%s255] sm:$0xf] %v256
                %v258 = vld [vmem:[%s254 + $0x8] sm:$0xf]
                %259 = vst [vmem:[%s255 + $0x4] sm:$0xf] %v258
              $region86: #{a_call__.1} parent=80 // loop_footer
                %s253 = sadd.s32 1, %s249
              $region87: #{a_call__.1} parent=80 // loop_footer_branch
                %248 = sbr.rel target = $region83
              $region88: #{a_call__.1} parent=80 // loop_exit
                _
            $region81: #{a_call__.1} parent=72 // pred_fallthru
              _
          $region73: #{a_call__.1} parent=68 // pred_fallthru
            _
          %283 = vnop
        $region69: #{a_call__.1} parent=23 // pred_fallthru
          _
      $region24: #{a_call__.1} parent=5 // pred_fallthru
        _
      %p284 = scmp.le.s32.totalorder 1, %s10
      %p285 = scmp.lt.s32.totalorder %s10, 3
      %p286 = pnand %p284, %p285
      %p287 = pneg %p286
      // Predicated region
      $region107: #{a_call__.1} parent=5 // pred_check
        _
      $region108: #{a_call__.1} parent=5 // pred_check_branch
        %289 = sbr.rel (%p286) target = $region110
      $region109: #{a_call__.1} parent=5 // pred_region
        %s290 = ssub.s32 %s10, 1
        %s291 = sand.u32 %s37, 1
        %s292 = sand.u32 %s37, 1
        %s293 = smul.addr %s292, 8
        %s294 = scalar_lea.vmem [#allocation2], %s293
        // Predicated region
        $region111: #{a_call__.1} parent=109 // pred_check
          %p295 = pneg %p50
        $region112: #{a_call__.1} parent=109 // pred_check_branch
          %297 = sbr.rel (%p295) target = $region114
        $region113: #{a_call__.1} parent=109 // pred_region
          _
        $region114: #{a_call__.1} parent=109 // pred_fallthru
          _
        %s298 = sand.u32 %s67, 1
        %s299 = sand.u32 %s67, 1
        %s300 = smul.addr %s299, 8
        %s301 = scalar_lea.vmem [#allocation3], %s300
        // Predicated region
        $region115: #{a_call__.1} parent=109 // pred_check
          %p302 = pneg %p80
        $region116: #{a_call__.1} parent=109 // pred_check_branch
          %304 = sbr.rel (%p302) target = $region118
        $region117: #{a_call__.1} parent=109 // pred_region
          _
        $region118: #{a_call__.1} parent=109 // pred_fallthru
          _
        %s305 = sand.u32 %s37, 1
        %s306 = sand.u32 %s37, 1
        %s307 = smul.addr %s306, 8
        %s308 = scalar_lea.vmem [#allocation2], %s307
        %p309 = pneg %p50
        %p310 = pneg %p47
        %s311 = sand.u32 %s67, 1
        %s312 = sand.u32 %s67, 1
        %s313 = smul.addr %s312, 8
        %s314 = scalar_lea.vmem [#allocation3], %s313
        %p315 = pneg %p80
        %p316 = pneg %p77
        %p317 = pneg %p101
        %p318 = pneg %p98
        %p319 = pneg %p122
        %p320 = pneg %p119
        %p321 = pneg %p150
        %p322 = pneg %p147
        %p323 = scmp.lt.s32.totalorder %s19, 1
        %s324 = scalar_select %p323, %s19, 1
        %p325 = scmp.lt.s32.totalorder %s20, 0
        %s326 = scalar_select %p325, %s20, 0
        %s327 = smul.addr %s324, 4
        %s328 = sadd.s32 %s326, %s327
        %s329 = smul.addr %s328, 8
        %s330 = scalar_lea.vmem %s4, %s329
        %s331 = sadd.s32 %s20, 1
        %p332 = scmp.lt.s32.totalorder %s19, 1
        %s333 = scalar_select %p332, %s19, 1
        %p334 = scmp.lt.s32.totalorder %s20, 0
        %s335 = scalar_select %p334, %s20, 0
        %s336 = smul.addr %s333, 4
        %s337 = sadd.s32 %s335, %s336
        %s338 = smul.addr %s337, 8
        %s339 = scalar_lea.vmem %s4, %s338
        %v341 = vld [vmem:[%s294] sm:$0xf]
        %v342 = vld [vmem:[%s294 + $0x4] sm:$0xf]
        %v343 = vld [vmem:[%s301] sm:$0xf]
        %v344 = vld [vmem:[%s301 + $0x4] sm:$0xf]
        %v347 = vunpack.c.l.b16 %v341
        %v348 = vunpack.c.l.b16 %v342
        %v349 = vpack.c.b16 %v348, %v347
        %v353 = vunpack.c.l.b16 %v343
        %v354 = vunpack.c.l.b16 %v344
        %v355 = vpack.c.b16 %v354, %v353
        %v356 = vld [vmem:[%s2] sm:$0xf]
        %v357 = vld [vmem:[%s2 + $0x4] sm:$0xf]
        %v358 = vld [vmem:[%s2 + $0x8] sm:$0xf]
        %v359 = vld [vmem:[%s2 + $0xc] sm:$0xf]
        %v360 = vld [vmem:[%s2 + $0x10] sm:$0xf]
        %v361 = vld [vmem:[%s2 + $0x14] sm:$0xf]
        %v362 = vld [vmem:[%s2 + $0x18] sm:$0xf]
        %v363 = vld [vmem:[%s2 + $0x1c] sm:$0xf]
        %v364 = vld [vmem:[%s2 + $0x20] sm:$0xf]
        %v365 = vld [vmem:[%s2 + $0x24] sm:$0xf]
        %v366 = vld [vmem:[%s2 + $0x28] sm:$0xf]
        %v367 = vld [vmem:[%s2 + $0x2c] sm:$0xf]
        %v368 = vld [vmem:[%s2 + $0x30] sm:$0xf]
        %v369 = vld [vmem:[%s2 + $0x34] sm:$0xf]
        %v370 = vld [vmem:[%s2 + $0x38] sm:$0xf]
        %v371 = vld [vmem:[%s2 + $0x3c] sm:$0xf]
        %v372 = vld [vmem:[%s2 + $0x40] sm:$0xf]
        %v373 = vld [vmem:[%s2 + $0x44] sm:$0xf]
        %v374 = vld [vmem:[%s2 + $0x48] sm:$0xf]
        %v375 = vld [vmem:[%s2 + $0x4c] sm:$0xf]
        %v376 = vld [vmem:[%s2 + $0x50] sm:$0xf]
        %v377 = vld [vmem:[%s2 + $0x54] sm:$0xf]
        %v378 = vld [vmem:[%s2 + $0x58] sm:$0xf]
        %v379 = vld [vmem:[%s2 + $0x5c] sm:$0xf]
        %v380 = vld [vmem:[%s2 + $0x60] sm:$0xf]
        %v381 = vld [vmem:[%s2 + $0x64] sm:$0xf]
        %v382 = vld [vmem:[%s2 + $0x68] sm:$0xf]
        %v383 = vld [vmem:[%s2 + $0x6c] sm:$0xf]
        %v384 = vld [vmem:[%s2 + $0x70] sm:$0xf]
        %v385 = vld [vmem:[%s2 + $0x74] sm:$0xf]
        %v386 = vld [vmem:[%s2 + $0x78] sm:$0xf]
        %v387 = vld [vmem:[%s2 + $0x7c] sm:$0xf]
        %v388 = vld [vmem:[%s2 + $0x80] sm:$0xf]
        %v389 = vld [vmem:[%s2 + $0x84] sm:$0xf]
        %v390 = vld [vmem:[%s2 + $0x88] sm:$0xf]
        %v391 = vld [vmem:[%s2 + $0x8c] sm:$0xf]
        %v392 = vld [vmem:[%s2 + $0x90] sm:$0xf]
        %v393 = vld [vmem:[%s2 + $0x94] sm:$0xf]
        %v394 = vld [vmem:[%s2 + $0x98] sm:$0xf]
        %v395 = vld [vmem:[%s2 + $0x9c] sm:$0xf]
        %v396 = vld [vmem:[%s2 + $0xa0] sm:$0xf]
        %v397 = vld [vmem:[%s2 + $0xa4] sm:$0xf]
        %v398 = vld [vmem:[%s2 + $0xa8] sm:$0xf]
        %v399 = vld [vmem:[%s2 + $0xac] sm:$0xf]
        %v400 = vld [vmem:[%s2 + $0xb0] sm:$0xf]
        %v401 = vld [vmem:[%s2 + $0xb4] sm:$0xf]
        %v402 = vld [vmem:[%s2 + $0xb8] sm:$0xf]
        %v403 = vld [vmem:[%s2 + $0xbc] sm:$0xf]
        %v404 = vld [vmem:[%s2 + $0xc0] sm:$0xf]
        %v405 = vld [vmem:[%s2 + $0xc4] sm:$0xf]
        %v406 = vld [vmem:[%s2 + $0xc8] sm:$0xf]
        %v407 = vld [vmem:[%s2 + $0xcc] sm:$0xf]
        %v408 = vld [vmem:[%s2 + $0xd0] sm:$0xf]
        %v409 = vld [vmem:[%s2 + $0xd4] sm:$0xf]
        %v410 = vld [vmem:[%s2 + $0xd8] sm:$0xf]
        %v411 = vld [vmem:[%s2 + $0xdc] sm:$0xf]
        %v412 = vld [vmem:[%s2 + $0xe0] sm:$0xf]
        %v413 = vld [vmem:[%s2 + $0xe4] sm:$0xf]
        %v414 = vld [vmem:[%s2 + $0xe8] sm:$0xf]
        %v415 = vld [vmem:[%s2 + $0xec] sm:$0xf]
        %v416 = vld [vmem:[%s2 + $0xf0] sm:$0xf]
        %v417 = vld [vmem:[%s2 + $0xf4] sm:$0xf]
        %v418 = vld [vmem:[%s2 + $0xf8] sm:$0xf]
        %v419 = vld [vmem:[%s2 + $0xfc] sm:$0xf]
        %v420 = vld [vmem:[%s2 + $0x100] sm:$0xf]
        %v421 = vld [vmem:[%s2 + $0x104] sm:$0xf]
        %v422 = vld [vmem:[%s2 + $0x108] sm:$0xf]
        %v423 = vld [vmem:[%s2 + $0x10c] sm:$0xf]
        %v424 = vld [vmem:[%s2 + $0x110] sm:$0xf]
        %v425 = vld [vmem:[%s2 + $0x114] sm:$0xf]
        %v426 = vld [vmem:[%s2 + $0x118] sm:$0xf]
        %v427 = vld [vmem:[%s2 + $0x11c] sm:$0xf]
        %v428 = vld [vmem:[%s2 + $0x120] sm:$0xf]
        %v429 = vld [vmem:[%s2 + $0x124] sm:$0xf]
        %v430 = vld [vmem:[%s2 + $0x128] sm:$0xf]
        %v431 = vld [vmem:[%s2 + $0x12c] sm:$0xf]
        %v432 = vld [vmem:[%s2 + $0x130] sm:$0xf]
        %v433 = vld [vmem:[%s2 + $0x134] sm:$0xf]
        %v434 = vld [vmem:[%s2 + $0x138] sm:$0xf]
        %v435 = vld [vmem:[%s2 + $0x13c] sm:$0xf]
        %v436 = vld [vmem:[%s2 + $0x140] sm:$0xf]
        %v437 = vld [vmem:[%s2 + $0x144] sm:$0xf]
        %v438 = vld [vmem:[%s2 + $0x148] sm:$0xf]
        %v439 = vld [vmem:[%s2 + $0x14c] sm:$0xf]
        %v440 = vld [vmem:[%s2 + $0x150] sm:$0xf]
        %v441 = vld [vmem:[%s2 + $0x154] sm:$0xf]
        %v442 = vld [vmem:[%s2 + $0x158] sm:$0xf]
        %v443 = vld [vmem:[%s2 + $0x15c] sm:$0xf]
        %v444 = vld [vmem:[%s2 + $0x160] sm:$0xf]
        %v445 = vld [vmem:[%s2 + $0x164] sm:$0xf]
        %v446 = vld [vmem:[%s2 + $0x168] sm:$0xf]
        %v447 = vld [vmem:[%s2 + $0x16c] sm:$0xf]
        %v448 = vld [vmem:[%s2 + $0x170] sm:$0xf]
        %v449 = vld [vmem:[%s2 + $0x174] sm:$0xf]
        %v450 = vld [vmem:[%s2 + $0x178] sm:$0xf]
        %v451 = vld [vmem:[%s2 + $0x17c] sm:$0xf]
        %v452 = vld [vmem:[%s3] sm:$0xff]
        %v453 = vld [vmem:[%s3 + $0x8] sm:$0xff]
        %v454 = vld [vmem:[%s3 + $0x10] sm:$0xff]
        %v455 = vld [vmem:[%s3 + $0x18] sm:$0xff]
        %v472 = vunpack.c.l.b16 %v372
        %v473 = vunpack.c.l.b16 %v373
        %v474 = vunpack.c.l.b16 %v374
        %v475 = vunpack.c.l.b16 %v375
        %v476 = vunpack.c.l.b16 %v376
        %v477 = vunpack.c.l.b16 %v377
        %v478 = vunpack.c.l.b16 %v378
        %v479 = vunpack.c.l.b16 %v379
        %v480 = vunpack.c.l.b16 %v380
        %v481 = vunpack.c.l.b16 %v381
        %v482 = vunpack.c.l.b16 %v382
        %v483 = vunpack.c.l.b16 %v383
        %v484 = vunpack.c.l.b16 %v384
        %v485 = vunpack.c.l.b16 %v385
        %v486 = vunpack.c.l.b16 %v386
        %v487 = vunpack.c.l.b16 %v387
        %v488 = vpack.c.b16 %v473, %v472
        %v489 = vpack.c.b16 %v475, %v474
        %v490 = vpack.c.b16 %v477, %v476
        %v491 = vpack.c.b16 %v479, %v478
        %v492 = vpack.c.b16 %v481, %v480
        %v493 = vpack.c.b16 %v483, %v482
        %v494 = vpack.c.b16 %v485, %v484
        %v495 = vpack.c.b16 %v487, %v486
        %496 = vrot.lane.b32.xlu0 %v349, 127
        %v497 = vpop.permute.xlu0 %496
        %498 = vrot.lane.b32.xlu0 %v355, 127
        %v499 = vpop.permute.xlu0 %498
        %vm500 = vcmask 1039360
        %v501 = vsel %vm500, %v497, %v499
        %vm503 = vcmask 130048
        %v505 = vsel %vm503, %v488, 0
        %v508 = vsel %vm503, %v489, 0
        %v511 = vsel %vm503, %v490, 0
        %v514 = vsel %vm503, %v491, 0
        %v517 = vsel %vm503, %v492, 0
        %v520 = vsel %vm503, %v493, 0
        %v523 = vsel %vm503, %v494, 0
        %v526 = vsel %vm503, %v495, 0
        %528 = vmatprep.subr.bf16.mxu0 0
        %529 = vmatpush1.bf16.msra.mxu0 %v501
        %530 = vmatprep.subr.bf16.mxu0 0
        %531 = vmatpush1.bf16.msra.mxu0 0
        %532 = vmatprep.subr.bf16.mxu0 0
        %533 = vmatpush1.bf16.msra.mxu0 0
        %534 = vmatprep.subr.bf16.mxu0 0
        %535 = vmatpush1.bf16.msra.mxu0 0
        %536 = vmatprep.subr.bf16.mxu0 0
        %537 = vmatpush1.bf16.msra.mxu0 0
        %538 = vmatprep.subr.bf16.mxu0 0
        %539 = vmatpush1.bf16.msra.mxu0 0
        %540 = vmatprep.subr.bf16.mxu0 0
        %541 = vmatpush1.bf16.msra.mxu0 0
        %542 = vmatprep.subr.bf16.mxu0 0
        %543 = vmatpush1.bf16.msra.mxu0 0
        %544 = vmatprep.subr.bf16.mxu0 0
        %545 = vmatpush1.bf16.msra.mxu0 0
        %546 = vmatprep.subr.bf16.mxu0 0
        %547 = vmatpush1.bf16.msra.mxu0 0
        %548 = vmatprep.subr.bf16.mxu0 0
        %549 = vmatpush1.bf16.msra.mxu0 0
        %550 = vmatprep.subr.bf16.mxu0 0
        %551 = vmatpush1.bf16.msra.mxu0 0
        %552 = vmatprep.subr.bf16.mxu0 0
        %553 = vmatpush1.bf16.msra.mxu0 0
        %554 = vmatprep.subr.bf16.mxu0 0
        %555 = vmatpush1.bf16.msra.mxu0 0
        %556 = vmatprep.subr.bf16.mxu0 0
        %557 = vmatpush1.bf16.msra.mxu0 0
        %558 = vmatprep.subr.bf16.mxu0 0
        %559 = vmatpush1.bf16.msra.mxu0 0
        %560 = vmatprep.mubr.bf16.mxu0 0
        %561 = vmatmul.mubr.bf16.gmra.mrb[0].mxu0 %v505
        %v562 = vpop.f32.mrb[0].mxu0
        %v563 = vadd.f32 0.0, %v562
        %v564 = vpop.f32.mrb[0].mxu0
        %v565 = vpop.f32.mrb[0].mxu0
        %v566 = vadd.f32 0.0, %v565
        %v567 = vpop.f32.mrb[0].mxu0
        %568 = vmatprep.mubr.bf16.mxu0 0
        %569 = vmatmul.mubr.bf16.gmra.mrb[0].mxu0 %v508
        %v570 = vpop.f32.mrb[0].mxu0
        %v571 = vadd.f32 0.0, %v570
        %v572 = vpop.f32.mrb[0].mxu0
        %v573 = vpop.f32.mrb[0].mxu0
        %v574 = vadd.f32 0.0, %v573
        %v575 = vpop.f32.mrb[0].mxu0
        %576 = vmatprep.mubr.bf16.mxu0 0
        %577 = vmatmul.mubr.bf16.gmra.mrb[0].mxu0 %v511
        %v578 = vpop.f32.mrb[0].mxu0
        %v579 = vadd.f32 0.0, %v578
        %v580 = vpop.f32.mrb[0].mxu0
        %v581 = vpop.f32.mrb[0].mxu0
        %v582 = vadd.f32 0.0, %v581
        %v583 = vpop.f32.mrb[0].mxu0
        %584 = vmatprep.mubr.bf16.mxu0 0
        %585 = vmatmul.mubr.bf16.gmra.mrb[0].mxu0 %v514
        %v586 = vpop.f32.mrb[0].mxu0
        %v587 = vadd.f32 0.0, %v586
        %v588 = vpop.f32.mrb[0].mxu0
        %v589 = vpop.f32.mrb[0].mxu0
        %v590 = vadd.f32 0.0, %v589
        %v591 = vpop.f32.mrb[0].mxu0
        %592 = vmatprep.mubr.bf16.mxu0 0
        %593 = vmatmul.mubr.bf16.gmra.mrb[0].mxu0 %v517
        %v594 = vpop.f32.mrb[0].mxu0
        %v595 = vadd.f32 0.0, %v594
        %v596 = vpop.f32.mrb[0].mxu0
        %v597 = vpop.f32.mrb[0].mxu0
        %v598 = vadd.f32 0.0, %v597
        %v599 = vpop.f32.mrb[0].mxu0
        %600 = vmatprep.mubr.bf16.mxu0 0
        %601 = vmatmul.mubr.bf16.gmra.mrb[0].mxu0 %v520
        %v602 = vpop.f32.mrb[0].mxu0
        %v603 = vadd.f32 0.0, %v602
        %v604 = vpop.f32.mrb[0].mxu0
        %v605 = vpop.f32.mrb[0].mxu0
        %v606 = vadd.f32 0.0, %v605
        %v607 = vpop.f32.mrb[0].mxu0
        %608 = vmatprep.mubr.bf16.mxu0 0
        %609 = vmatmul.mubr.bf16.gmra.mrb[0].mxu0 %v523
        %v610 = vpop.f32.mrb[0].mxu0
        %v611 = vadd.f32 0.0, %v610
        %v612 = vpop.f32.mrb[0].mxu0
        %v613 = vpop.f32.mrb[0].mxu0
        %v614 = vadd.f32 0.0, %v613
        %v615 = vpop.f32.mrb[0].mxu0
        %616 = vmatprep.mubr.bf16.mxu0 0
        %617 = vmatmul.mubr.bf16.gmra.mrb[0].mxu0 %v526
        %v618 = vpop.f32.mrb[0].mxu0
        %v619 = vadd.f32 0.0, %v618
        %v620 = vpop.f32.mrb[0].mxu0
        %v621 = vpop.f32.mrb[0].mxu0
        %v622 = vadd.f32 0.0, %v621
        %v623 = vpop.f32.mrb[0].mxu0
        %624 = vdwg.mxu0
        %v641 = vunpack.c.l.b16 %v356
        %v642 = vunpack.c.l.b16 %v357
        %v643 = vunpack.c.l.b16 %v358
        %v644 = vunpack.c.l.b16 %v359
        %v645 = vunpack.c.l.b16 %v360
        %v646 = vunpack.c.l.b16 %v361
        %v647 = vunpack.c.l.b16 %v362
        %v648 = vunpack.c.l.b16 %v363
        %v649 = vunpack.c.l.b16 %v364
        %v650 = vunpack.c.l.b16 %v365
        %v651 = vunpack.c.l.b16 %v366
        %v652 = vunpack.c.l.b16 %v367
        %v653 = vunpack.c.l.b16 %v368
        %v654 = vunpack.c.l.b16 %v369
        %v655 = vunpack.c.l.b16 %v370
        %v656 = vunpack.c.l.b16 %v371
        %v657 = vpack.c.b16 %v642, %v641
        %v658 = vpack.c.b16 %v644, %v643
        %v659 = vpack.c.b16 %v646, %v645
        %v660 = vpack.c.b16 %v648, %v647
        %v661 = vpack.c.b16 %v650, %v649
        %v662 = vpack.c.b16 %v652, %v651
        %v663 = vpack.c.b16 %v654, %v653
        %v664 = vpack.c.b16 %v656, %v655
        %v666 = vsel %vm503, %v657, 0
        %v669 = vsel %vm503, %v658, 0
        %v672 = vsel %vm503, %v659, 0
        %v675 = vsel %vm503, %v660, 0
        %v678 = vsel %vm503, %v661, 0
        %v681 = vsel %vm503, %v662, 0
        %v684 = vsel %vm503, %v663, 0
        %v687 = vsel %vm503, %v664, 0
        %689 = vmatprep.subr.bf16.mxu0 0
        %690 = vmatpush1.bf16.msra.mxu0 %v349
        %691 = vmatprep.subr.bf16.mxu0 0
        %692 = vmatpush1.bf16.msra.mxu0 0
        %693 = vmatprep.subr.bf16.mxu0 0
        %694 = vmatpush1.bf16.msra.mxu0 0
        %695 = vmatprep.subr.bf16.mxu0 0
        %696 = vmatpush1.bf16.msra.mxu0 0
        %697 = vmatprep.subr.bf16.mxu0 0
        %698 = vmatpush1.bf16.msra.mxu0 0
        %699 = vmatprep.subr.bf16.mxu0 0
        %700 = vmatpush1.bf16.msra.mxu0 0
        %701 = vmatprep.subr.bf16.mxu0 0
        %702 = vmatpush1.bf16.msra.mxu0 0
        %703 = vmatprep.subr.bf16.mxu0 0
        %704 = vmatpush1.bf16.msra.mxu0 0
        %705 = vmatprep.subr.bf16.mxu0 0
        %706 = vmatpush1.bf16.msra.mxu0 0
        %707 = vmatprep.subr.bf16.mxu0 0
        %708 = vmatpush1.bf16.msra.mxu0 0
        %709 = vmatprep.subr.bf16.mxu0 0
        %710 = vmatpush1.bf16.msra.mxu0 0
        %711 = vmatprep.subr.bf16.mxu0 0
        %712 = vmatpush1.bf16.msra.mxu0 0
        %713 = vmatprep.subr.bf16.mxu0 0
        %714 = vmatpush1.bf16.msra.mxu0 0
        %715 = vmatprep.subr.bf16.mxu0 0
        %716 = vmatpush1.bf16.msra.mxu0 0
        %717 = vmatprep.subr.bf16.mxu0 0
        %718 = vmatpush1.bf16.msra.mxu0 0
        %719 = vmatprep.subr.bf16.mxu0 0
        %720 = vmatpush1.bf16.msra.mxu0 0
        %721 = vmatprep.mubr.bf16.mxu0 0
        %722 = vmatmul.mubr.bf16.gmra.mrb[0].mxu0 %v666
        %v723 = vpop.f32.mrb[0].mxu0
        %v724 = vadd.f32 %v563, %v723
        %v725 = vpop.f32.mrb[0].mxu0
        %v726 = vpop.f32.mrb[0].mxu0
        %v727 = vadd.f32 %v566, %v726
        %v728 = vpop.f32.mrb[0].mxu0
        %729 = vmatprep.mubr.bf16.mxu0 0
        %730 = vmatmul.mubr.bf16.gmra.mrb[0].mxu0 %v669
        %v731 = vpop.f32.mrb[0].mxu0
        %v732 = vadd.f32 %v571, %v731
        %v733 = vpop.f32.mrb[0].mxu0
        %v734 = vpop.f32.mrb[0].mxu0
        %v735 = vadd.f32 %v574, %v734
        %v736 = vpop.f32.mrb[0].mxu0
        %737 = vmatprep.mubr.bf16.mxu0 0
        %738 = vmatmul.mubr.bf16.gmra.mrb[0].mxu0 %v672
        %v739 = vpop.f32.mrb[0].mxu0
        %v740 = vadd.f32 %v579, %v739
        %v741 = vpop.f32.mrb[0].mxu0
        %v742 = vpop.f32.mrb[0].mxu0
        %v743 = vadd.f32 %v582, %v742
        %v744 = vpop.f32.mrb[0].mxu0
        %745 = vmatprep.mubr.bf16.mxu0 0
        %746 = vmatmul.mubr.bf16.gmra.mrb[0].mxu0 %v675
        %v747 = vpop.f32.mrb[0].mxu0
        %v748 = vadd.f32 %v587, %v747
        %v749 = vpop.f32.mrb[0].mxu0
        %v750 = vpop.f32.mrb[0].mxu0
        %v751 = vadd.f32 %v590, %v750
        %v752 = vpop.f32.mrb[0].mxu0
        %753 = vmatprep.mubr.bf16.mxu0 0
        %754 = vmatmul.mubr.bf16.gmra.mrb[0].mxu0 %v678
        %v755 = vpop.f32.mrb[0].mxu0
        %v756 = vadd.f32 %v595, %v755
        %v757 = vpop.f32.mrb[0].mxu0
        %v758 = vpop.f32.mrb[0].mxu0
        %v759 = vadd.f32 %v598, %v758
        %v760 = vpop.f32.mrb[0].mxu0
        %761 = vmatprep.mubr.bf16.mxu0 0
        %762 = vmatmul.mubr.bf16.gmra.mrb[0].mxu0 %v681
        %v763 = vpop.f32.mrb[0].mxu0
        %v764 = vadd.f32 %v603, %v763
        %v765 = vpop.f32.mrb[0].mxu0
        %v766 = vpop.f32.mrb[0].mxu0
        %v767 = vadd.f32 %v606, %v766
        %v768 = vpop.f32.mrb[0].mxu0
        %769 = vmatprep.mubr.bf16.mxu0 0
        %770 = vmatmul.mubr.bf16.gmra.mrb[0].mxu0 %v684
        %v771 = vpop.f32.mrb[0].mxu0
        %v772 = vadd.f32 %v611, %v771
        %v773 = vpop.f32.mrb[0].mxu0
        %v774 = vpop.f32.mrb[0].mxu0
        %v775 = vadd.f32 %v614, %v774
        %v776 = vpop.f32.mrb[0].mxu0
        %777 = vmatprep.mubr.bf16.mxu0 0
        %778 = vmatmul.mubr.bf16.gmra.mrb[0].mxu0 %v687
        %v779 = vpop.f32.mrb[0].mxu0
        %v780 = vadd.f32 %v619, %v779
        %v781 = vpop.f32.mrb[0].mxu0
        %v782 = vpop.f32.mrb[0].mxu0
        %v783 = vadd.f32 %v622, %v782
        %v784 = vpop.f32.mrb[0].mxu0
        %785 = vdwg.mxu0
        %v802 = vunpack.c.l.b16 %v388
        %v803 = vunpack.c.l.b16 %v389
        %v804 = vunpack.c.l.b16 %v390
        %v805 = vunpack.c.l.b16 %v391
        %v806 = vunpack.c.l.b16 %v392
        %v807 = vunpack.c.l.b16 %v393
        %v808 = vunpack.c.l.b16 %v394
        %v809 = vunpack.c.l.b16 %v395
        %v810 = vunpack.c.l.b16 %v396
        %v811 = vunpack.c.l.b16 %v397
        %v812 = vunpack.c.l.b16 %v398
        %v813 = vunpack.c.l.b16 %v399
        %v814 = vunpack.c.l.b16 %v400
        %v815 = vunpack.c.l.b16 %v401
        %v816 = vunpack.c.l.b16 %v402
        %v817 = vunpack.c.l.b16 %v403
        %v818 = vpack.c.b16 %v803, %v802
        %v819 = vpack.c.b16 %v805, %v804
        %v820 = vpack.c.b16 %v807, %v806
        %v821 = vpack.c.b16 %v809, %v808
        %v822 = vpack.c.b16 %v811, %v810
        %v823 = vpack.c.b16 %v813, %v812
        %v824 = vpack.c.b16 %v815, %v814
        %v825 = vpack.c.b16 %v817, %v816
        %826 = vrot.lane.b32.xlu0 %v349, 126
        %v827 = vpop.permute.xlu0 %826
        %828 = vrot.lane.b32.xlu0 %v355, 126
        %v829 = vpop.permute.xlu0 %828
        %vm830 = vcmask 1031168
        %v831 = vsel %vm830, %v827, %v829
        %v834 = vsel %vm503, %v818, 0
        %v837 = vsel %vm503, %v819, 0
        %v840 = vsel %vm503, %v820, 0
        %v843 = vsel %vm503, %v821, 0
        %v846 = vsel %vm503, %v822, 0
        %v849 = vsel %vm503, %v823, 0
        %v852 = vsel %vm503, %v824, 0
        %v855 = vsel %vm503, %v825, 0
        %857 = vmatprep.subr.bf16.mxu0 0
        %858 = vmatpush1.bf16.msra.mxu0 %v831
        %859 = vmatprep.subr.bf16.mxu0 0
        %860 = vmatpush1.bf16.msra.mxu0 0
        %861 = vmatprep.subr.bf16.mxu0 0
        %862 = vmatpush1.bf16.msra.mxu0 0
        %863 = vmatprep.subr.bf16.mxu0 0
        %864 = vmatpush1.bf16.msra.mxu0 0
        %865 = vmatprep.subr.bf16.mxu0 0
        %866 = vmatpush1.bf16.msra.mxu0 0
        %867 = vmatprep.subr.bf16.mxu0 0
        %868 = vmatpush1.bf16.msra.mxu0 0
        %869 = vmatprep.subr.bf16.mxu0 0
        %870 = vmatpush1.bf16.msra.mxu0 0
        %871 = vmatprep.subr.bf16.mxu0 0
        %872 = vmatpush1.bf16.msra.mxu0 0
        %873 = vmatprep.subr.bf16.mxu0 0
        %874 = vmatpush1.bf16.msra.mxu0 0
        %875 = vmatprep.subr.bf16.mxu0 0
        %876 = vmatpush1.bf16.msra.mxu0 0
        %877 = vmatprep.subr.bf16.mxu0 0
        %878 = vmatpush1.bf16.msra.mxu0 0
        %879 = vmatprep.subr.bf16.mxu0 0
        %880 = vmatpush1.bf16.msra.mxu0 0
        %881 = vmatprep.subr.bf16.mxu0 0
        %882 = vmatpush1.bf16.msra.mxu0 0
        %883 = vmatprep.subr.bf16.mxu0 0
        %884 = vmatpush1.bf16.msra.mxu0 0
        %885 = vmatprep.subr.bf16.mxu0 0
        %886 = vmatpush1.bf16.msra.mxu0 0
        %887 = vmatprep.subr.bf16.mxu0 0
        %888 = vmatpush1.bf16.msra.mxu0 0
        %889 = vmatprep.mubr.bf16.mxu0 0
        %890 = vmatmul.mubr.bf16.gmra.mrb[0].mxu0 %v834
        %v891 = vpop.f32.mrb[0].mxu0
        %v892 = vadd.f32 0.0, %v891
        %v893 = vpop.f32.mrb[0].mxu0
        %v894 = vpop.f32.mrb[0].mxu0
        %v895 = vadd.f32 0.0, %v894
        %v896 = vpop.f32.mrb[0].mxu0
        %897 = vmatprep.mubr.bf16.mxu0 0
        %898 = vmatmul.mubr.bf16.gmra.mrb[0].mxu0 %v837
        %v899 = vpop.f32.mrb[0].mxu0
        %v900 = vadd.f32 0.0, %v899
        %v901 = vpop.f32.mrb[0].mxu0
        %v902 = vpop.f32.mrb[0].mxu0
        %v903 = vadd.f32 0.0, %v902
        %v904 = vpop.f32.mrb[0].mxu0
        %905 = vmatprep.mubr.bf16.mxu0 0
        %906 = vmatmul.mubr.bf16.gmra.mrb[0].mxu0 %v840
        %v907 = vpop.f32.mrb[0].mxu0
        %v908 = vadd.f32 0.0, %v907
        %v909 = vpop.f32.mrb[0].mxu0
        %v910 = vpop.f32.mrb[0].mxu0
        %v911 = vadd.f32 0.0, %v910
        %v912 = vpop.f32.mrb[0].mxu0
        %913 = vmatprep.mubr.bf16.mxu0 0
        %914 = vmatmul.mubr.bf16.gmra.mrb[0].mxu0 %v843
        %v915 = vpop.f32.mrb[0].mxu0
        %v916 = vadd.f32 0.0, %v915
        %v917 = vpop.f32.mrb[0].mxu0
        %v918 = vpop.f32.mrb[0].mxu0
        %v919 = vadd.f32 0.0, %v918
        %v920 = vpop.f32.mrb[0].mxu0
        %921 = vmatprep.mubr.bf16.mxu0 0
        %922 = vmatmul.mubr.bf16.gmra.mrb[0].mxu0 %v846
        %v923 = vpop.f32.mrb[0].mxu0
        %v924 = vadd.f32 0.0, %v923
        %v925 = vpop.f32.mrb[0].mxu0
        %v926 = vpop.f32.mrb[0].mxu0
        %v927 = vadd.f32 0.0, %v926
        %v928 = vpop.f32.mrb[0].mxu0
        %929 = vmatprep.mubr.bf16.mxu0 0
        %930 = vmatmul.mubr.bf16.gmra.mrb[0].mxu0 %v849
        %v931 = vpop.f32.mrb[0].mxu0
        %v932 = vadd.f32 0.0, %v931
        %v933 = vpop.f32.mrb[0].mxu0
        %v934 = vpop.f32.mrb[0].mxu0
        %v935 = vadd.f32 0.0, %v934
        %v936 = vpop.f32.mrb[0].mxu0
        %937 = vmatprep.mubr.bf16.mxu0 0
        %938 = vmatmul.mubr.bf16.gmra.mrb[0].mxu0 %v852
        %v939 = vpop.f32.mrb[0].mxu0
        %v940 = vadd.f32 0.0, %v939
        %v941 = vpop.f32.mrb[0].mxu0
        %v942 = vpop.f32.mrb[0].mxu0
        %v943 = vadd.f32 0.0, %v942
        %v944 = vpop.f32.mrb[0].mxu0
        %945 = vmatprep.mubr.bf16.mxu0 0
        %946 = vmatmul.mubr.bf16.gmra.mrb[0].mxu0 %v855
        %v947 = vpop.f32.mrb[0].mxu0
        %v948 = vadd.f32 0.0, %v947
        %v949 = vpop.f32.mrb[0].mxu0
        %v950 = vpop.f32.mrb[0].mxu0
        %v951 = vadd.f32 0.0, %v950
        %v952 = vpop.f32.mrb[0].mxu0
        %953 = vdwg.mxu0
        %v954 = vadd.f32 %v724, %v892
        %v955 = vadd.f32 %v727, %v895
        %v956 = vadd.f32 %v732, %v900
        %v957 = vadd.f32 %v735, %v903
        %v958 = vadd.f32 %v740, %v908
        %v959 = vadd.f32 %v743, %v911
        %v960 = vadd.f32 %v748, %v916
        %v961 = vadd.f32 %v751, %v919
        %v962 = vadd.f32 %v756, %v924
        %v963 = vadd.f32 %v759, %v927
        %v964 = vadd.f32 %v764, %v932
        %v965 = vadd.f32 %v767, %v935
        %v966 = vadd.f32 %v772, %v940
        %v967 = vadd.f32 %v775, %v943
        %v968 = vadd.f32 %v780, %v948
        %v969 = vadd.f32 %v783, %v951
        %v986 = vunpack.c.l.b16 %v420
        %v987 = vunpack.c.l.b16 %v421
        %v988 = vunpack.c.l.b16 %v422
        %v989 = vunpack.c.l.b16 %v423
        %v990 = vunpack.c.l.b16 %v424
        %v991 = vunpack.c.l.b16 %v425
        %v992 = vunpack.c.l.b16 %v426
        %v993 = vunpack.c.l.b16 %v427
        %v994 = vunpack.c.l.b16 %v428
        %v995 = vunpack.c.l.b16 %v429
        %v996 = vunpack.c.l.b16 %v430
        %v997 = vunpack.c.l.b16 %v431
        %v998 = vunpack.c.l.b16 %v432
        %v999 = vunpack.c.l.b16 %v433
        %v1000 = vunpack.c.l.b16 %v434
        %v1001 = vunpack.c.l.b16 %v435
        %v1002 = vpack.c.b16 %v987, %v986
        %v1003 = vpack.c.b16 %v989, %v988
        %v1004 = vpack.c.b16 %v991, %v990
        %v1005 = vpack.c.b16 %v993, %v992
        %v1006 = vpack.c.b16 %v995, %v994
        %v1007 = vpack.c.b16 %v997, %v996
        %v1008 = vpack.c.b16 %v999, %v998
        %v1009 = vpack.c.b16 %v1001, %v1000
        %v1011 = vsel %vm503, %v1002, 0
        %v1014 = vsel %vm503, %v1003, 0
        %v1017 = vsel %vm503, %v1004, 0
        %v1020 = vsel %vm503, %v1005, 0
        %v1023 = vsel %vm503, %v1006, 0
        %v1026 = vsel %vm503, %v1007, 0
        %v1029 = vsel %vm503, %v1008, 0
        %v1032 = vsel %vm503, %v1009, 0
        %1034 = vmatprep.subr.bf16.mxu0 0
        %1035 = vmatpush1.bf16.msra.mxu0 %v501
        %1036 = vmatprep.subr.bf16.mxu0 0
        %1037 = vmatpush1.bf16.msra.mxu0 0
        %1038 = vmatprep.subr.bf16.mxu0 0
        %1039 = vmatpush1.bf16.msra.mxu0 0
        %1040 = vmatprep.subr.bf16.mxu0 0
        %1041 = vmatpush1.bf16.msra.mxu0 0
        %1042 = vmatprep.subr.bf16.mxu0 0
        %1043 = vmatpush1.bf16.msra.mxu0 0
        %1044 = vmatprep.subr.bf16.mxu0 0
        %1045 = vmatpush1.bf16.msra.mxu0 0
        %1046 = vmatprep.subr.bf16.mxu0 0
        %1047 = vmatpush1.bf16.msra.mxu0 0
        %1048 = vmatprep.subr.bf16.mxu0 0
        %1049 = vmatpush1.bf16.msra.mxu0 0
        %1050 = vmatprep.subr.bf16.mxu0 0
        %1051 = vmatpush1.bf16.msra.mxu0 0
        %1052 = vmatprep.subr.bf16.mxu0 0
        %1053 = vmatpush1.bf16.msra.mxu0 0
        %1054 = vmatprep.subr.bf16.mxu0 0
        %1055 = vmatpush1.bf16.msra.mxu0 0
        %1056 = vmatprep.subr.bf16.mxu0 0
        %1057 = vmatpush1.bf16.msra.mxu0 0
        %1058 = vmatprep.subr.bf16.mxu0 0
        %1059 = vmatpush1.bf16.msra.mxu0 0
        %1060 = vmatprep.subr.bf16.mxu0 0
        %1061 = vmatpush1.bf16.msra.mxu0 0
        %1062 = vmatprep.subr.bf16.mxu0 0
        %1063 = vmatpush1.bf16.msra.mxu0 0
        %1064 = vmatprep.subr.bf16.mxu0 0
        %1065 = vmatpush1.bf16.msra.mxu0 0
        %1066 = vmatprep.mubr.bf16.mxu0 0
        %1067 = vmatmul.mubr.bf16.gmra.mrb[0].mxu0 %v1011
        %v1068 = vpop.f32.mrb[0].mxu0
        %v1069 = vadd.f32 0.0, %v1068
        %v1070 = vpop.f32.mrb[0].mxu0
        %v1071 = vpop.f32.mrb[0].mxu0
        %v1072 = vadd.f32 0.0, %v1071
        %v1073 = vpop.f32.mrb[0].mxu0
        %1074 = vmatprep.mubr.bf16.mxu0 0
        %1075 = vmatmul.mubr.bf16.gmra.mrb[0].mxu0 %v1014
        %v1076 = vpop.f32.mrb[0].mxu0
        %v1077 = vadd.f32 0.0, %v1076
        %v1078 = vpop.f32.mrb[0].mxu0
        %v1079 = vpop.f32.mrb[0].mxu0
        %v1080 = vadd.f32 0.0, %v1079
        %v1081 = vpop.f32.mrb[0].mxu0
        %1082 = vmatprep.mubr.bf16.mxu0 0
        %1083 = vmatmul.mubr.bf16.gmra.mrb[0].mxu0 %v1017
        %v1084 = vpop.f32.mrb[0].mxu0
        %v1085 = vadd.f32 0.0, %v1084
        %v1086 = vpop.f32.mrb[0].mxu0
        %v1087 = vpop.f32.mrb[0].mxu0
        %v1088 = vadd.f32 0.0, %v1087
        %v1089 = vpop.f32.mrb[0].mxu0
        %1090 = vmatprep.mubr.bf16.mxu0 0
        %1091 = vmatmul.mubr.bf16.gmra.mrb[0].mxu0 %v1020
        %v1092 = vpop.f32.mrb[0].mxu0
        %v1093 = vadd.f32 0.0, %v1092
        %v1094 = vpop.f32.mrb[0].mxu0
        %v1095 = vpop.f32.mrb[0].mxu0
        %v1096 = vadd.f32 0.0, %v1095
        %v1097 = vpop.f32.mrb[0].mxu0
        %1098 = vmatprep.mubr.bf16.mxu0 0
        %1099 = vmatmul.mubr.bf16.gmra.mrb[0].mxu0 %v1023
        %v1100 = vpop.f32.mrb[0].mxu0
        %v1101 = vadd.f32 0.0, %v1100
        %v1102 = vpop.f32.mrb[0].mxu0
        %v1103 = vpop.f32.mrb[0].mxu0
        %v1104 = vadd.f32 0.0, %v1103
        %v1105 = vpop.f32.mrb[0].mxu0
        %1106 = vmatprep.mubr.bf16.mxu0 0
        %1107 = vmatmul.mubr.bf16.gmra.mrb[0].mxu0 %v1026
        %v1108 = vpop.f32.mrb[0].mxu0
        %v1109 = vadd.f32 0.0, %v1108
        %v1110 = vpop.f32.mrb[0].mxu0
        %v1111 = vpop.f32.mrb[0].mxu0
        %v1112 = vadd.f32 0.0, %v1111
        %v1113 = vpop.f32.mrb[0].mxu0
        %1114 = vmatprep.mubr.bf16.mxu0 0
        %1115 = vmatmul.mubr.bf16.gmra.mrb[0].mxu0 %v1029
        %v1116 = vpop.f32.mrb[0].mxu0
        %v1117 = vadd.f32 0.0, %v1116
        %v1118 = vpop.f32.mrb[0].mxu0
        %v1119 = vpop.f32.mrb[0].mxu0
        %v1120 = vadd.f32 0.0, %v1119
        %v1121 = vpop.f32.mrb[0].mxu0
        %1122 = vmatprep.mubr.bf16.mxu0 0
        %1123 = vmatmul.mubr.bf16.gmra.mrb[0].mxu0 %v1032
        %v1124 = vpop.f32.mrb[0].mxu0
        %v1125 = vadd.f32 0.0, %v1124
        %v1126 = vpop.f32.mrb[0].mxu0
        %v1127 = vpop.f32.mrb[0].mxu0
        %v1128 = vadd.f32 0.0, %v1127
        %v1129 = vpop.f32.mrb[0].mxu0
        %1130 = vdwg.mxu0
        %v1147 = vunpack.c.l.b16 %v404
        %v1148 = vunpack.c.l.b16 %v405
        %v1149 = vunpack.c.l.b16 %v406
        %v1150 = vunpack.c.l.b16 %v407
        %v1151 = vunpack.c.l.b16 %v408
        %v1152 = vunpack.c.l.b16 %v409
        %v1153 = vunpack.c.l.b16 %v410
        %v1154 = vunpack.c.l.b16 %v411
        %v1155 = vunpack.c.l.b16 %v412
        %v1156 = vunpack.c.l.b16 %v413
        %v1157 = vunpack.c.l.b16 %v414
        %v1158 = vunpack.c.l.b16 %v415
        %v1159 = vunpack.c.l.b16 %v416
        %v1160 = vunpack.c.l.b16 %v417
        %v1161 = vunpack.c.l.b16 %v418
        %v1162 = vunpack.c.l.b16 %v419
        %v1163 = vpack.c.b16 %v1148, %v1147
        %v1164 = vpack.c.b16 %v1150, %v1149
        %v1165 = vpack.c.b16 %v1152, %v1151
        %v1166 = vpack.c.b16 %v1154, %v1153
        %v1167 = vpack.c.b16 %v1156, %v1155
        %v1168 = vpack.c.b16 %v1158, %v1157
        %v1169 = vpack.c.b16 %v1160, %v1159
        %v1170 = vpack.c.b16 %v1162, %v1161
        %v1172 = vsel %vm503, %v1163, 0
        %v1175 = vsel %vm503, %v1164, 0
        %v1178 = vsel %vm503, %v1165, 0
        %v1181 = vsel %vm503, %v1166, 0
        %v1184 = vsel %vm503, %v1167, 0
        %v1187 = vsel %vm503, %v1168, 0
        %v1190 = vsel %vm503, %v1169, 0
        %v1193 = vsel %vm503, %v1170, 0
        %1195 = vmatprep.subr.bf16.mxu0 0
        %1196 = vmatpush1.bf16.msra.mxu0 %v349
        %1197 = vmatprep.subr.bf16.mxu0 0
        %1198 = vmatpush1.bf16.msra.mxu0 0
        %1199 = vmatprep.subr.bf16.mxu0 0
        %1200 = vmatpush1.bf16.msra.mxu0 0
        %1201 = vmatprep.subr.bf16.mxu0 0
        %1202 = vmatpush1.bf16.msra.mxu0 0
        %1203 = vmatprep.subr.bf16.mxu0 0
        %1204 = vmatpush1.bf16.msra.mxu0 0
        %1205 = vmatprep.subr.bf16.mxu0 0
        %1206 = vmatpush1.bf16.msra.mxu0 0
        %1207 = vmatprep.subr.bf16.mxu0 0
        %1208 = vmatpush1.bf16.msra.mxu0 0
        %1209 = vmatprep.subr.bf16.mxu0 0
        %1210 = vmatpush1.bf16.msra.mxu0 0
        %1211 = vmatprep.subr.bf16.mxu0 0
        %1212 = vmatpush1.bf16.msra.mxu0 0
        %1213 = vmatprep.subr.bf16.mxu0 0
        %1214 = vmatpush1.bf16.msra.mxu0 0
        %1215 = vmatprep.subr.bf16.mxu0 0
        %1216 = vmatpush1.bf16.msra.mxu0 0
        %1217 = vmatprep.subr.bf16.mxu0 0
        %1218 = vmatpush1.bf16.msra.mxu0 0
        %1219 = vmatprep.subr.bf16.mxu0 0
        %1220 = vmatpush1.bf16.msra.mxu0 0
        %1221 = vmatprep.subr.bf16.mxu0 0
        %1222 = vmatpush1.bf16.msra.mxu0 0
        %1223 = vmatprep.subr.bf16.mxu0 0
        %1224 = vmatpush1.bf16.msra.mxu0 0
        %1225 = vmatprep.subr.bf16.mxu0 0
        %1226 = vmatpush1.bf16.msra.mxu0 0
        %1227 = vmatprep.mubr.bf16.mxu0 0
        %1228 = vmatmul.mubr.bf16.gmra.mrb[0].mxu0 %v1172
        %v1229 = vpop.f32.mrb[0].mxu0
        %v1230 = vadd.f32 %v1069, %v1229
        %v1231 = vpop.f32.mrb[0].mxu0
        %v1232 = vpop.f32.mrb[0].mxu0
        %v1233 = vadd.f32 %v1072, %v1232
        %v1234 = vpop.f32.mrb[0].mxu0
        %1235 = vmatprep.mubr.bf16.mxu0 0
        %1236 = vmatmul.mubr.bf16.gmra.mrb[0].mxu0 %v1175
        %v1237 = vpop.f32.mrb[0].mxu0
        %v1238 = vadd.f32 %v1077, %v1237
        %v1239 = vpop.f32.mrb[0].mxu0
        %v1240 = vpop.f32.mrb[0].mxu0
        %v1241 = vadd.f32 %v1080, %v1240
        %v1242 = vpop.f32.mrb[0].mxu0
        %1243 = vmatprep.mubr.bf16.mxu0 0
        %1244 = vmatmul.mubr.bf16.gmra.mrb[0].mxu0 %v1178
        %v1245 = vpop.f32.mrb[0].mxu0
        %v1246 = vadd.f32 %v1085, %v1245
        %v1247 = vpop.f32.mrb[0].mxu0
        %v1248 = vpop.f32.mrb[0].mxu0
        %v1249 = vadd.f32 %v1088, %v1248
        %v1250 = vpop.f32.mrb[0].mxu0
        %1251 = vmatprep.mubr.bf16.mxu0 0
        %1252 = vmatmul.mubr.bf16.gmra.mrb[0].mxu0 %v1181
        %v1253 = vpop.f32.mrb[0].mxu0
        %v1254 = vadd.f32 %v1093, %v1253
        %v1255 = vpop.f32.mrb[0].mxu0
        %v1256 = vpop.f32.mrb[0].mxu0
        %v1257 = vadd.f32 %v1096, %v1256
        %v1258 = vpop.f32.mrb[0].mxu0
        %1259 = vmatprep.mubr.bf16.mxu0 0
        %1260 = vmatmul.mubr.bf16.gmra.mrb[0].mxu0 %v1184
        %v1261 = vpop.f32.mrb[0].mxu0
        %v1262 = vadd.f32 %v1101, %v1261
        %v1263 = vpop.f32.mrb[0].mxu0
        %v1264 = vpop.f32.mrb[0].mxu0
        %v1265 = vadd.f32 %v1104, %v1264
        %v1266 = vpop.f32.mrb[0].mxu0
        %1267 = vmatprep.mubr.bf16.mxu0 0
        %1268 = vmatmul.mubr.bf16.gmra.mrb[0].mxu0 %v1187
        %v1269 = vpop.f32.mrb[0].mxu0
        %v1270 = vadd.f32 %v1109, %v1269
        %v1271 = vpop.f32.mrb[0].mxu0
        %v1272 = vpop.f32.mrb[0].mxu0
        %v1273 = vadd.f32 %v1112, %v1272
        %v1274 = vpop.f32.mrb[0].mxu0
        %1275 = vmatprep.mubr.bf16.mxu0 0
        %1276 = vmatmul.mubr.bf16.gmra.mrb[0].mxu0 %v1190
        %v1277 = vpop.f32.mrb[0].mxu0
        %v1278 = vadd.f32 %v1117, %v1277
        %v1279 = vpop.f32.mrb[0].mxu0
        %v1280 = vpop.f32.mrb[0].mxu0
        %v1281 = vadd.f32 %v1120, %v1280
        %v1282 = vpop.f32.mrb[0].mxu0
        %1283 = vmatprep.mubr.bf16.mxu0 0
        %1284 = vmatmul.mubr.bf16.gmra.mrb[0].mxu0 %v1193
        %v1285 = vpop.f32.mrb[0].mxu0
        %v1286 = vadd.f32 %v1125, %v1285
        %v1287 = vpop.f32.mrb[0].mxu0
        %v1288 = vpop.f32.mrb[0].mxu0
        %v1289 = vadd.f32 %v1128, %v1288
        %v1290 = vpop.f32.mrb[0].mxu0
        %1291 = vdwg.mxu0
        %v1308 = vunpack.c.l.b16 %v436
        %v1309 = vunpack.c.l.b16 %v437
        %v1310 = vunpack.c.l.b16 %v438
        %v1311 = vunpack.c.l.b16 %v439
        %v1312 = vunpack.c.l.b16 %v440
        %v1313 = vunpack.c.l.b16 %v441
        %v1314 = vunpack.c.l.b16 %v442
        %v1315 = vunpack.c.l.b16 %v443
        %v1316 = vunpack.c.l.b16 %v444
        %v1317 = vunpack.c.l.b16 %v445
        %v1318 = vunpack.c.l.b16 %v446
        %v1319 = vunpack.c.l.b16 %v447
        %v1320 = vunpack.c.l.b16 %v448
        %v1321 = vunpack.c.l.b16 %v449
        %v1322 = vunpack.c.l.b16 %v450
        %v1323 = vunpack.c.l.b16 %v451
        %v1324 = vpack.c.b16 %v1309, %v1308
        %v1325 = vpack.c.b16 %v1311, %v1310
        %v1326 = vpack.c.b16 %v1313, %v1312
        %v1327 = vpack.c.b16 %v1315, %v1314
        %v1328 = vpack.c.b16 %v1317, %v1316
        %v1329 = vpack.c.b16 %v1319, %v1318
        %v1330 = vpack.c.b16 %v1321, %v1320
        %v1331 = vpack.c.b16 %v1323, %v1322
        %v1333 = vsel %vm503, %v1324, 0
        %v1336 = vsel %vm503, %v1325, 0
        %v1339 = vsel %vm503, %v1326, 0
        %v1342 = vsel %vm503, %v1327, 0
        %v1345 = vsel %vm503, %v1328, 0
        %v1348 = vsel %vm503, %v1329, 0
        %v1351 = vsel %vm503, %v1330, 0
        %v1354 = vsel %vm503, %v1331, 0
        %1356 = vmatprep.subr.bf16.mxu0 0
        %1357 = vmatpush1.bf16.msra.mxu0 %v831
        %1358 = vmatprep.subr.bf16.mxu0 0
        %1359 = vmatpush1.bf16.msra.mxu0 0
        %1360 = vmatprep.subr.bf16.mxu0 0
        %1361 = vmatpush1.bf16.msra.mxu0 0
        %1362 = vmatprep.subr.bf16.mxu0 0
        %1363 = vmatpush1.bf16.msra.mxu0 0
        %1364 = vmatprep.subr.bf16.mxu0 0
        %1365 = vmatpush1.bf16.msra.mxu0 0
        %1366 = vmatprep.subr.bf16.mxu0 0
        %1367 = vmatpush1.bf16.msra.mxu0 0
        %1368 = vmatprep.subr.bf16.mxu0 0
        %1369 = vmatpush1.bf16.msra.mxu0 0
        %1370 = vmatprep.subr.bf16.mxu0 0
        %1371 = vmatpush1.bf16.msra.mxu0 0
        %1372 = vmatprep.subr.bf16.mxu0 0
        %1373 = vmatpush1.bf16.msra.mxu0 0
        %1374 = vmatprep.subr.bf16.mxu0 0
        %1375 = vmatpush1.bf16.msra.mxu0 0
        %1376 = vmatprep.subr.bf16.mxu0 0
        %1377 = vmatpush1.bf16.msra.mxu0 0
        %1378 = vmatprep.subr.bf16.mxu0 0
        %1379 = vmatpush1.bf16.msra.mxu0 0
        %1380 = vmatprep.subr.bf16.mxu0 0
        %1381 = vmatpush1.bf16.msra.mxu0 0
        %1382 = vmatprep.subr.bf16.mxu0 0
        %1383 = vmatpush1.bf16.msra.mxu0 0
        %1384 = vmatprep.subr.bf16.mxu0 0
        %1385 = vmatpush1.bf16.msra.mxu0 0
        %1386 = vmatprep.subr.bf16.mxu0 0
        %1387 = vmatpush1.bf16.msra.mxu0 0
        %1388 = vmatprep.mubr.bf16.mxu0 0
        %1389 = vmatmul.mubr.bf16.gmra.mrb[0].mxu0 %v1333
        %v1390 = vpop.f32.mrb[0].mxu0
        %v1391 = vadd.f32 0.0, %v1390
        %v1392 = vpop.f32.mrb[0].mxu0
        %v1393 = vpop.f32.mrb[0].mxu0
        %v1394 = vadd.f32 0.0, %v1393
        %v1395 = vpop.f32.mrb[0].mxu0
        %1396 = vmatprep.mubr.bf16.mxu0 0
        %1397 = vmatmul.mubr.bf16.gmra.mrb[0].mxu0 %v1336
        %v1398 = vpop.f32.mrb[0].mxu0
        %v1399 = vadd.f32 0.0, %v1398
        %v1400 = vpop.f32.mrb[0].mxu0
        %v1401 = vpop.f32.mrb[0].mxu0
        %v1402 = vadd.f32 0.0, %v1401
        %v1403 = vpop.f32.mrb[0].mxu0
        %1404 = vmatprep.mubr.bf16.mxu0 0
        %1405 = vmatmul.mubr.bf16.gmra.mrb[0].mxu0 %v1339
        %v1406 = vpop.f32.mrb[0].mxu0
        %v1407 = vadd.f32 0.0, %v1406
        %v1408 = vpop.f32.mrb[0].mxu0
        %v1409 = vpop.f32.mrb[0].mxu0
        %v1410 = vadd.f32 0.0, %v1409
        %v1411 = vpop.f32.mrb[0].mxu0
        %1412 = vmatprep.mubr.bf16.mxu0 0
        %1413 = vmatmul.mubr.bf16.gmra.mrb[0].mxu0 %v1342
        %v1414 = vpop.f32.mrb[0].mxu0
        %v1415 = vadd.f32 0.0, %v1414
        %v1416 = vpop.f32.mrb[0].mxu0
        %v1417 = vpop.f32.mrb[0].mxu0
        %v1418 = vadd.f32 0.0, %v1417
        %v1419 = vpop.f32.mrb[0].mxu0
        %1420 = vmatprep.mubr.bf16.mxu0 0
        %1421 = vmatmul.mubr.bf16.gmra.mrb[0].mxu0 %v1345
        %v1422 = vpop.f32.mrb[0].mxu0
        %v1423 = vadd.f32 0.0, %v1422
        %v1424 = vpop.f32.mrb[0].mxu0
        %v1425 = vpop.f32.mrb[0].mxu0
        %v1426 = vadd.f32 0.0, %v1425
        %v1427 = vpop.f32.mrb[0].mxu0
        %1428 = vmatprep.mubr.bf16.mxu0 0
        %1429 = vmatmul.mubr.bf16.gmra.mrb[0].mxu0 %v1348
        %v1430 = vpop.f32.mrb[0].mxu0
        %v1431 = vadd.f32 0.0, %v1430
        %v1432 = vpop.f32.mrb[0].mxu0
        %v1433 = vpop.f32.mrb[0].mxu0
        %v1434 = vadd.f32 0.0, %v1433
        %v1435 = vpop.f32.mrb[0].mxu0
        %1436 = vmatprep.mubr.bf16.mxu0 0
        %1437 = vmatmul.mubr.bf16.gmra.mrb[0].mxu0 %v1351
        %v1438 = vpop.f32.mrb[0].mxu0
        %v1439 = vadd.f32 0.0, %v1438
        %v1440 = vpop.f32.mrb[0].mxu0
        %v1441 = vpop.f32.mrb[0].mxu0
        %v1442 = vadd.f32 0.0, %v1441
        %v1443 = vpop.f32.mrb[0].mxu0
        %1444 = vmatprep.mubr.bf16.mxu0 0
        %1445 = vmatmul.mubr.bf16.gmra.mrb[0].mxu0 %v1354
        %v1446 = vpop.f32.mrb[0].mxu0
        %v1447 = vadd.f32 0.0, %v1446
        %v1448 = vpop.f32.mrb[0].mxu0
        %v1449 = vpop.f32.mrb[0].mxu0
        %v1450 = vadd.f32 0.0, %v1449
        %v1451 = vpop.f32.mrb[0].mxu0
        %1452 = vdwg.mxu0
        %v1453 = vadd.f32 %v1230, %v1391
        %v1454 = vadd.f32 %v1233, %v1394
        %v1455 = vadd.f32 %v1238, %v1399
        %v1456 = vadd.f32 %v1241, %v1402
        %v1457 = vadd.f32 %v1246, %v1407
        %v1458 = vadd.f32 %v1249, %v1410
        %v1459 = vadd.f32 %v1254, %v1415
        %v1460 = vadd.f32 %v1257, %v1418
        %v1461 = vadd.f32 %v1262, %v1423
        %v1462 = vadd.f32 %v1265, %v1426
        %v1463 = vadd.f32 %v1270, %v1431
        %v1464 = vadd.f32 %v1273, %v1434
        %v1465 = vadd.f32 %v1278, %v1439
        %v1466 = vadd.f32 %v1281, %v1442
        %v1467 = vadd.f32 %v1286, %v1447
        %v1468 = vadd.f32 %v1289, %v1450
        %v1469 = vmul.f32 %v954, %v954
        %v1470 = vmul.f32 %v955, %v955
        %v1471 = vmul.f32 %v956, %v956
        %v1472 = vmul.f32 %v957, %v957
        %v1473 = vmul.f32 %v958, %v958
        %v1474 = vmul.f32 %v959, %v959
        %v1475 = vmul.f32 %v960, %v960
        %v1476 = vmul.f32 %v961, %v961
        %v1477 = vmul.f32 %v962, %v962
        %v1478 = vmul.f32 %v963, %v963
        %v1479 = vmul.f32 %v964, %v964
        %v1480 = vmul.f32 %v965, %v965
        %v1481 = vmul.f32 %v966, %v966
        %v1482 = vmul.f32 %v967, %v967
        %v1483 = vmul.f32 %v968, %v968
        %v1484 = vmul.f32 %v969, %v969
        %v1485 = vmul.f32 %v1453, %v1453
        %v1486 = vmul.f32 %v1454, %v1454
        %v1487 = vmul.f32 %v1455, %v1455
        %v1488 = vmul.f32 %v1456, %v1456
        %v1489 = vmul.f32 %v1457, %v1457
        %v1490 = vmul.f32 %v1458, %v1458
        %v1491 = vmul.f32 %v1459, %v1459
        %v1492 = vmul.f32 %v1460, %v1460
        %v1493 = vmul.f32 %v1461, %v1461
        %v1494 = vmul.f32 %v1462, %v1462
        %v1495 = vmul.f32 %v1463, %v1463
        %v1496 = vmul.f32 %v1464, %v1464
        %v1497 = vmul.f32 %v1465, %v1465
        %v1498 = vmul.f32 %v1466, %v1466
        %v1499 = vmul.f32 %v1467, %v1467
        %v1500 = vmul.f32 %v1468, %v1468
        %v1501 = vadd.f32 %v1469, %v1485
        %v1502 = vadd.f32 %v1470, %v1486
        %v1503 = vadd.f32 %v1471, %v1487
        %v1504 = vadd.f32 %v1472, %v1488
        %v1505 = vadd.f32 %v1473, %v1489
        %v1506 = vadd.f32 %v1474, %v1490
        %v1507 = vadd.f32 %v1475, %v1491
        %v1508 = vadd.f32 %v1476, %v1492
        %v1509 = vadd.f32 %v1477, %v1493
        %v1510 = vadd.f32 %v1478, %v1494
        %v1511 = vadd.f32 %v1479, %v1495
        %v1512 = vadd.f32 %v1480, %v1496
        %v1513 = vadd.f32 %v1481, %v1497
        %v1514 = vadd.f32 %v1482, %v1498
        %v1515 = vadd.f32 %v1483, %v1499
        %v1516 = vadd.f32 %v1484, %v1500
        %1517 = vmatprep.subr.mxu0 0.0
        %1518 = vmatpush1.msra.mxu0 %v1501
        %1519 = vmatprep.subr.mxu0 0.0
        %1520 = vmatpush1.msra.mxu0 %v1502
        %1521 = vmatprep.subr.mxu0 0.0
        %1522 = vmatpush1.msra.mxu0 %v1503
        %1523 = vmatprep.subr.mxu0 0.0
        %1524 = vmatpush1.msra.mxu0 %v1504
        %1525 = vmatprep.subr.mxu0 0.0
        %1526 = vmatpush1.msra.mxu0 %v1505
        %1527 = vmatprep.subr.mxu0 0.0
        %1528 = vmatpush1.msra.mxu0 %v1506
        %1529 = vmatprep.subr.mxu0 0.0
        %1530 = vmatpush1.msra.mxu0 %v1507
        %1531 = vmatprep.subr.mxu0 0.0
        %1532 = vmatpush1.msra.mxu0 %v1508
        %1533 = vmatprep.subr.mxu0 0.0
        %1534 = vmatpush1.msra.mxu0 %v1509
        %1535 = vmatprep.subr.mxu0 0.0
        %1536 = vmatpush1.msra.mxu0 %v1510
        %1537 = vmatprep.subr.mxu0 0.0
        %1538 = vmatpush1.msra.mxu0 %v1511
        %1539 = vmatprep.subr.mxu0 0.0
        %1540 = vmatpush1.msra.mxu0 %v1512
        %1541 = vmatprep.subr.mxu0 0.0
        %1542 = vmatpush1.msra.mxu0 %v1513
        %1543 = vmatprep.subr.mxu0 0.0
        %1544 = vmatpush1.msra.mxu0 %v1514
        %1545 = vmatprep.subr.mxu0 0.0
        %1546 = vmatpush1.msra.mxu0 %v1515
        %1547 = vmatprep.subr.mxu0 0.0
        %1548 = vmatpush1.msra.mxu0 %v1516
        %1549 = vmatprep.subr.mxu0 0.0
        %1550 = vmatpush1.msra.mxu0 0.0
        %1551 = vmatprep.subr.mxu0 0.0
        %1552 = vmatpush1.msra.mxu0 0.0
        %1553 = vmatprep.subr.mxu0 0.0
        %1554 = vmatpush1.msra.mxu0 0.0
        %1555 = vmatprep.subr.mxu0 0.0
        %1556 = vmatpush1.msra.mxu0 0.0
        %1557 = vmatprep.subr.mxu0 0.0
        %1558 = vmatpush1.msra.mxu0 0.0
        %1559 = vmatprep.subr.mxu0 0.0
        %1560 = vmatpush1.msra.mxu0 0.0
        %1561 = vmatprep.subr.mxu0 0.0
        %1562 = vmatpush1.msra.mxu0 0.0
        %1563 = vmatprep.subr.mxu0 0.0
        %1564 = vmatpush1.msra.mxu0 0.0
        %1565 = vmatprep.subr.mxu0 0.0
        %1566 = vmatpush1.msra.mxu0 0.0
        %1567 = vmatprep.subr.mxu0 0.0
        %1568 = vmatpush1.msra.mxu0 0.0
        %1569 = vmatprep.subr.mxu0 0.0
        %1570 = vmatpush1.msra.mxu0 0.0
        %1571 = vmatprep.subr.mxu0 0.0
        %1572 = vmatpush1.msra.mxu0 0.0
        %1573 = vmatprep.subr.mxu0 0.0
        %1574 = vmatpush1.msra.mxu0 0.0
        %1575 = vmatprep.subr.mxu0 0.0
        %1576 = vmatpush1.msra.mxu0 0.0
        %1577 = vmatprep.subr.mxu0 0.0
        %1578 = vmatpush1.msra.mxu0 0.0
        %1579 = vmatprep.subr.mxu0 0.0
        %1580 = vmatpush1.msra.mxu0 0.0
        %1581 = vmatprep.mubr.f32.mxu0 0.0
        %1582 = vmatmul.mubr.f32.gmra.mrb[0].mxu0 %v452
        %v1583 = vpop.f32.mrb[0].mxu0
        %v1584 = vadd.f32 0.0, %v1583
        %v1585 = vpop.f32.mrb[0].mxu0
        %1586 = vmatprep.mubr.f32.mxu0 0.0
        %1587 = vmatmul.mubr.f32.gmra.mrb[0].mxu0 %v453
        %v1588 = vpop.f32.mrb[0].mxu0
        %v1589 = vadd.f32 0.0, %v1588
        %v1590 = vpop.f32.mrb[0].mxu0
        %1591 = vmatprep.mubr.f32.mxu0 0.0
        %1592 = vmatmul.mubr.f32.gmra.mrb[0].mxu0 %v454
        %v1593 = vpop.f32.mrb[0].mxu0
        %v1594 = vadd.f32 0.0, %v1593
        %v1595 = vpop.f32.mrb[0].mxu0
        %1596 = vmatprep.mubr.f32.mxu0 0.0
        %1597 = vmatmul.mubr.f32.gmra.mrb[0].mxu0 %v455
        %v1598 = vpop.f32.mrb[0].mxu0
        %v1599 = vadd.f32 0.0, %v1598
        %v1600 = vpop.f32.mrb[0].mxu0
        %1601 = vdwg.mxu0
        %v1602 = vmax.f32 %v1584, 1e-09
        %v1603 = vmax.f32 %v1589, 1e-09
        %v1604 = vmax.f32 %v1594, 1e-09
        %v1605 = vmax.f32 %v1599, 1e-09
        %v1606 = vmin.f32 %v1602, 1e+09
        %v1607 = vmin.f32 %v1603, 1e+09
        %v1608 = vmin.f32 %v1604, 1e+09
        %v1609 = vmin.f32 %v1605, 1e+09
        %v1610 = vlog2.pop %v1606
        %v1611 = vmul.f32 %v1610, 0.6931472
        %v1612 = vlog2.pop %v1607
        %v1613 = vmul.f32 %v1612, 0.6931472
        %v1614 = vlog2.pop %v1608
        %v1615 = vmul.f32 %v1614, 0.6931472
        %v1616 = vlog2.pop %v1609
        %v1617 = vmul.f32 %v1616, 0.6931472
        %1618 = vst [vmem:[%s339] sm:$0xff] %v1611
        %1619 = vst [vmem:[%s339 + $0x8] sm:$0xff] %v1613
        %1620 = vst [vmem:[%s339 + $0x10] sm:$0xff] %v1615
        %1621 = vst [vmem:[%s339 + $0x18] sm:$0xff] %v1617
        %p1622 = scmp.lt.s32.totalorder %s19, 1
        %s1623 = scalar_select %p1622, %s19, 1
        %p1624 = scmp.lt.s32.totalorder %s20, 0
        %s1625 = scalar_select %p1624, %s20, 0
        %s1626 = smul.addr %s1623, 4
        %s1627 = sadd.s32 %s1625, %s1626
        %s1628 = smul.addr %s1627, 8
        %s1629 = scalar_lea.vmem %s4, %s1628
        // Predicated region
        $region119: #{a_call__.1} parent=109 // pred_check
          %p1630 = pneg %p147
        $region120: #{a_call__.1} parent=109 // pred_check_branch
          %1632 = sbr.rel (%p1630) target = $region122
        $region121: #{a_call__.1} parent=109 // pred_region
          _
        $region122: #{a_call__.1} parent=109 // pred_fallthru
          _
      $region110: #{a_call__.1} parent=5 // pred_fallthru
        _
      %p1633 = scmp.le.s32.totalorder 2, %s10
      // Predicated region
      $region123: #{a_call__.1} parent=5 // pred_check
        %p1634 = pneg %p1633
      $region124: #{a_call__.1} parent=5 // pred_check_branch
        %1636 = sbr.rel (%p1634) target = $region126
      $region125: #{a_call__.1} parent=5 // pred_region
        %s1637 = ssub.s32 %s10, 2
        // Predicated region
        $region127: #{a_call__.1} parent=125 // pred_check
          %p1638 = pneg %p153
        $region128: #{a_call__.1} parent=125 // pred_check_branch
          %1640 = sbr.rel (%p1638) target = $region130
        $region129: #{a_call__.1} parent=125 // pred_region
          %p1641 = scmp.lt.s32.totalorder %s21, 1
          %s1642 = scalar_select %p1641, %s21, 1
          %p1643 = scmp.lt.s32.totalorder %s22, 0
          %s1644 = scalar_select %p1643, %s22, 0
          %s1645 = smul.addr %s1642, 4
          %s1646 = sadd.s32 %s1644, %s1645
          %s1647 = smul.addr %s1646, 8
          %s1648 = scalar_lea.vmem %s4, %s1647
        $region130: #{a_call__.1} parent=125 // pred_fallthru
          _
      $region126: #{a_call__.1} parent=5 // pred_fallthru
        _
    $region6: #{a_call__.1} parent=1 // loop_footer
      %s14 = sadd.s32 1, %s10
    $region7: #{a_call__.1} parent=1 // loop_footer_branch
      %9 = sbr.rel target = $region3
    $region8: #{a_call__.1} parent=1 // loop_exit
      _

</llo_original>
